<compile_context>
chip_gen: v7x
topology: tpu7x:2x2x1
jax: 0.10.0
libtpu: 0.0.40
codegen_flags: <defaults>
</compile_context>

<pallas_src>
import functools

import jax
import jax.numpy as jnp
import numpy as np
from jax.experimental import pallas as pl
from jax.experimental.pallas import tpu as pltpu


def _lstm_kernel(ids_ref, embed_ref, w_ref, b_ref, hc0_ref,
                 logits_ref, hc_ref, *,
                 seq_len, batch, embed_dim, hidden, w_pad):
    S, B, E, H = seq_len, batch, embed_dim, hidden

    # Coalesced weight slab: rows [0:E]=W_ih^T, [E:E+H]=W_hh^T, [E+H:E+2H]=W_fc^T.
    wih = w_ref[0:E, 0:4 * H]                    # (E, 4H)
    whh = w_ref[E:E + H, 0:4 * H]                # (H, 4H) resident for the loop
    wfc = w_ref[E + H:E + 2 * H, :]              # (H, W_pad)
    b_gate = b_ref[0:1, 0:4 * H]                 # (1, 4H)  (= b_ih + b_hh)
    b_out = b_ref[1:2, :]                        # (1, W_pad)

    # --- In-kernel embedding gather (token ids live in SMEM via scalar prefetch).
    rows = [embed_ref[pl.ds(ids_ref[b, t], 1), :]          # (1, E) each
            for t in range(S) for b in range(B)]
    x_all = jnp.concatenate(rows, axis=0)                   # (S*B, E)

    # --- Batched input->hidden projection for ALL timesteps (off the serial path),
    #     kept in vregs (S*B x 4H = 16 x 128 f32 = 2 vregs).
    xg_all = jnp.dot(x_all, wih,
                     preferred_element_type=jnp.float32) + b_gate  # (S*B, 4H)

    h = hc0_ref[:, 0:H]                                      # (B, H)
    c = hc0_ref[:, H:2 * H]                                  # (B, H)

    # --- Fully unrolled recurrence; only h @ W_hh^T is serially dependent.
    hs = []
    for t in range(S):
        gates = xg_all[t * B:(t + 1) * B, :] + jnp.dot(
            h, whh, preferred_element_type=jnp.float32)      # (B, 4H)
        # Whole-tile activations (gates is a single vreg), then lane slices.
        sig = jax.nn.sigmoid(gates)
        tnh = jnp.tanh(gates)
        i_g = sig[:, 0 * H:1 * H]
        f_g = sig[:, 1 * H:2 * H]
        g_g = tnh[:, 2 * H:3 * H]
        o_g = sig[:, 3 * H:4 * H]
        c = f_g * c + i_g * g_g
        h = o_g * jnp.tanh(c)
        hs.append(h)                                          # stays in vregs

    # Fused (h_n | c_n) output.
    hc_ref[...] = jnp.concatenate([h, c], axis=1)             # (B, 2H)

    # --- Batched output projection after the loop, lane-dense 128-wide stores.
    hs_all = jnp.concatenate(hs, axis=0)                      # (S*B, H)
    logits_all = jnp.dot(hs_all, wfc,
                         preferred_element_type=jnp.float32) + b_out  # (S*B, W_pad)
    for t in range(S):
        logits_ref[:, t * w_pad:(t + 1) * w_pad] = \
            logits_all[t * B:(t + 1) * B, :]


def lstm_forward_pallas(ids, embed, h0, c0, w_ih, w_hh, b_ih, b_hh, w_fc, b_fc):
    """ids: int32 (B, S) tokens. Returns (logits (B, S, V), h_n (B, H), c_n (B, H))."""
    B, S = ids.shape
    V, E = embed.shape
    H = w_hh.shape[1]
    W_pad = -(-max(4 * H, V) // 128) * 128       # 128 for H=32, V=26

    # Coalesced, lane-padded weight / bias slabs (folded by jit; tiny).
    w_all = jnp.zeros((E + 2 * H, W_pad), jnp.float32)
    w_all = w_all.at[0:E, 0:4 * H].set(jnp.transpose(w_ih).astype(jnp.float32))
    w_all = w_all.at[E:E + H, 0:4 * H].set(jnp.transpose(w_hh).astype(jnp.float32))
    w_all = w_all.at[E + H:E + 2 * H, 0:V].set(jnp.transpose(w_fc).astype(jnp.float32))
    b_all = jnp.zeros((2, W_pad), jnp.float32)
    b_all = b_all.at[0, 0:4 * H].set((b_ih + b_hh).astype(jnp.float32))
    b_all = b_all.at[1, 0:V].set(b_fc.astype(jnp.float32))

    hc0 = jnp.concatenate([h0[0], c0[0]], axis=1).astype(jnp.float32)   # (B, 2H)

    kernel = functools.partial(_lstm_kernel, seq_len=S, batch=B,
                               embed_dim=E, hidden=H, w_pad=W_pad)

    grid_spec = pltpu.PrefetchScalarGridSpec(
        num_scalar_prefetch=1,                   # token ids -> SMEM
        grid=(1,),                               # whole sequence in one grid step
        in_specs=[
            pl.BlockSpec((V, E), lambda i, ids: (0, 0)),              # embed table
            pl.BlockSpec((E + 2 * H, W_pad), lambda i, ids: (0, 0)),  # weight slab
            pl.BlockSpec((2, W_pad), lambda i, ids: (0, 0)),          # bias slab
            pl.BlockSpec((B, 2 * H), lambda i, ids: (0, 0)),          # (h0|c0)
        ],
        out_specs=[
            pl.BlockSpec((B, S * W_pad), lambda i, ids: (0, 0)),      # logits, lane-dense
            pl.BlockSpec((B, 2 * H), lambda i, ids: (0, 0)),          # (h_n|c_n)
        ],
    )

    logits_flat, hc = pl.pallas_call(
        kernel,
        out_shape=(
            jax.ShapeDtypeStruct((B, S * W_pad), jnp.float32),
            jax.ShapeDtypeStruct((B, 2 * H), jnp.float32),
        ),
        grid_spec=grid_spec,
        compiler_params=pltpu.CompilerParams(
            dimension_semantics=("arbitrary",)),   # single sequential step
    )(ids.astype(jnp.int32), embed.astype(jnp.float32), w_all, b_all, hc0)

    logits = logits_flat.reshape(B, S, W_pad)[:, :, :V]   # free reshape + vocab slice
    return logits, hc[:, :H], hc[:, H:]


@jax.jit
def simple_lstm_forward(params, x_tokens, hidden_cell):
    """PyTorch-equivalent forward.

    Args:
      x_tokens: int32 (batch, seq_len)
      hidden_cell: (h0, c0), each (1, batch, hidden)
    Returns:
      (logits (batch, seq_len, vocab), (h_n, c_n)) with h_n/c_n (1, batch, hidden)
    """
    h0, c0 = hidden_cell
    logits, h_n, c_n = lstm_forward_pallas(
        x_tokens, params["embed"], h0, c0,
        params["w_ih"], params["w_hh"], params["b_ih"], params["b_hh"],
        params["w_fc"], params["b_fc"])
    return logits, (h_n[None, ...], c_n[None, ...])


def _reference_forward(params, x_tokens, hidden_cell):
    """Pure-JAX reference (lax.scan) with identical semantics."""
    h0, c0 = hidden_cell
    x_emb = params["embed"][x_tokens]                  # (B, S, E)
    H = params["w_hh"].shape[1]
    bias = params["b_ih"] + params["b_hh"]

    def step(carry, x_t):
        h, c = carry
        gates = x_t @ params["w_ih"].T + h @ params["w_hh"].T + bias
        i = jax.nn.sigmoid(gates[:, 0 * H:1 * H])
        f = jax.nn.sigmoid(gates[:, 1 * H:2 * H])
        g = jnp.tanh(gates[:, 2 * H:3 * H])
        o = jax.nn.sigmoid(gates[:, 3 * H:4 * H])
        c_new = f * c + i * g
        h_new = o * jnp.tanh(c_new)
        return (h_new, c_new), h_new

    (h_n, c_n), hs = jax.lax.scan(step, (h0[0], c0[0]),
                                  jnp.transpose(x_emb, (1, 0, 2)))
    out = jnp.transpose(hs, (1, 0, 2))                 # (B, S, H)
    logits = out @ params["w_fc"].T + params["b_fc"]
    return logits, (h_n[None, ...], c_n[None, ...])


def init_params(key, vocab_size, embedding_dim, hidden_size):
    ks = jax.random.split(key, 7)
    bound = 1.0 / np.sqrt(hidden_size)
    u = lambda k, shape: jax.random.uniform(k, shape, jnp.float32, -bound, bound)
    return {
        "embed": jax.random.normal(ks[0], (vocab_size, embedding_dim), jnp.float32),
        "w_ih": u(ks[1], (4 * hidden_size, embedding_dim)),
        "w_hh": u(ks[2], (4 * hidden_size, hidden_size)),
        "b_ih": u(ks[3], (4 * hidden_size,)),
        "b_hh": u(ks[4], (4 * hidden_size,)),
        "w_fc": u(ks[5], (vocab_size, hidden_size)),
        "b_fc": u(ks[6], (vocab_size,)),
    }


if __name__ == "__main__":
    VOCAB_SIZE = 26     # len('abcdefghijklmnopqrstuvwxyz')
    EMBED_DIM = 16
    HIDDEN = 32
    BATCH = 2
    SEQ = 8

    key = jax.random.PRNGKey(0)
    pkey, xkey = jax.random.split(key)
    params = init_params(pkey, VOCAB_SIZE, EMBED_DIM, HIDDEN)

    x_tokens = jax.random.randint(xkey, (BATCH, SEQ), 0, VOCAB_SIZE, jnp.int32)
    h0 = jnp.zeros((1, BATCH, HIDDEN), jnp.float32)
    c0 = jnp.zeros((1, BATCH, HIDDEN), jnp.float32)

    logits, (h_n, c_n) = simple_lstm_forward(params, x_tokens, (h0, c0))
    jax.block_until_ready((logits, h_n, c_n))

    ref_logits, (ref_h, ref_c) = _reference_forward(params, x_tokens, (h0, c0))
    assert logits.shape == (BATCH, SEQ, VOCAB_SIZE)
    assert h_n.shape == (1, BATCH, HIDDEN) and c_n.shape == (1, BATCH, HIDDEN)
    np.testing.assert_allclose(np.asarray(logits), np.asarray(ref_logits),
                               rtol=2e-5, atol=2e-5)
    np.testing.assert_allclose(np.asarray(h_n), np.asarray(ref_h),
                               rtol=2e-5, atol=2e-5)
    np.testing.assert_allclose(np.asarray(c_n), np.asarray(ref_c),
                               rtol=2e-5, atol=2e-5)

    print("KERNEL_OK")
</pallas_src>

<mosaic_0001>
module attributes {stable_mosaic.version = 11 : i64} {
  func.func @_lstm_kernel(%arg0: i32, %arg1: memref<2x8xi32, #tpu.memory_space<smem>>, %arg2: memref<26x16xf32, #tpu.memory_space<vmem>>, %arg3: memref<80x128xf32, #tpu.memory_space<vmem>>, %arg4: memref<2x128xf32, #tpu.memory_space<vmem>>, %arg5: memref<2x64xf32, #tpu.memory_space<vmem>>, %arg6: memref<2x1024xf32, #tpu.memory_space<vmem>>, %arg7: memref<2x64xf32, #tpu.memory_space<vmem>>) attributes {dimension_semantics = [#tpu.dimension_semantics<arbitrary>], iteration_bounds = array<i64: 1>, scalar_prefetch = 1 : i64, scratch_operands = 0 : i64, tpu.core_type = #tpu.core_type<tc>, window_params = [{pipeline_mode = #tpu.pipeline_mode<synchronous>, transform_indices = @transform_0, window_bounds = array<i64: 26, 16>}, {pipeline_mode = #tpu.pipeline_mode<synchronous>, transform_indices = @transform_1, window_bounds = array<i64: 80, 128>}, {pipeline_mode = #tpu.pipeline_mode<synchronous>, transform_indices = @transform_2, window_bounds = array<i64: 2, 128>}, {pipeline_mode = #tpu.pipeline_mode<synchronous>, transform_indices = @transform_3, window_bounds = array<i64: 2, 64>}, {pipeline_mode = #tpu.pipeline_mode<synchronous>, transform_indices = @transform_4, window_bounds = array<i64: 2, 1024>}, {pipeline_mode = #tpu.pipeline_mode<synchronous>, transform_indices = @transform_5, window_bounds = array<i64: 2, 64>}]} {
    %c0 = arith.constant 0 : index
    %c0_0 = arith.constant 0 : index
    %0 = vector.load %arg3[%c0, %c0_0] : memref<80x128xf32, #tpu.memory_space<vmem>>, vector<16x128xf32>
    %c16 = arith.constant 16 : index
    %c0_1 = arith.constant 0 : index
    %1 = vector.load %arg3[%c16, %c0_1] : memref<80x128xf32, #tpu.memory_space<vmem>>, vector<32x128xf32>
    %c48 = arith.constant 48 : index
    %c0_2 = arith.constant 0 : index
    %2 = vector.load %arg3[%c48, %c0_2] : memref<80x128xf32, #tpu.memory_space<vmem>>, vector<32x128xf32>
    %c0_3 = arith.constant 0 : index
    %c0_4 = arith.constant 0 : index
    %3 = vector.load %arg4[%c0_3, %c0_4] : memref<2x128xf32, #tpu.memory_space<vmem>>, vector<1x128xf32>
    %c1 = arith.constant 1 : index
    %c0_5 = arith.constant 0 : index
    %4 = vector.load %arg4[%c1, %c0_5] : memref<2x128xf32, #tpu.memory_space<vmem>>, vector<1x128xf32>
    %c0_6 = arith.constant 0 : index
    %c0_7 = arith.constant 0 : index
    %5 = memref.load %arg1[%c0_6, %c0_7] : memref<2x8xi32, #tpu.memory_space<smem>>
    %6 = arith.index_cast %5 : i32 to index
    %c0_8 = arith.constant 0 : index
    %7 = vector.load %arg2[%6, %c0_8] : memref<26x16xf32, #tpu.memory_space<vmem>>, vector<1x16xf32>
    %c1_9 = arith.constant 1 : index
    %c0_10 = arith.constant 0 : index
    %8 = memref.load %arg1[%c1_9, %c0_10] : memref<2x8xi32, #tpu.memory_space<smem>>
    %9 = arith.index_cast %8 : i32 to index
    %c0_11 = arith.constant 0 : index
    %10 = vector.load %arg2[%9, %c0_11] : memref<26x16xf32, #tpu.memory_space<vmem>>, vector<1x16xf32>
    %c0_12 = arith.constant 0 : index
    %c1_13 = arith.constant 1 : index
    %11 = memref.load %arg1[%c0_12, %c1_13] : memref<2x8xi32, #tpu.memory_space<smem>>
    %12 = arith.index_cast %11 : i32 to index
    %c0_14 = arith.constant 0 : index
    %13 = vector.load %arg2[%12, %c0_14] : memref<26x16xf32, #tpu.memory_space<vmem>>, vector<1x16xf32>
    %c1_15 = arith.constant 1 : index
    %c1_16 = arith.constant 1 : index
    %14 = memref.load %arg1[%c1_15, %c1_16] : memref<2x8xi32, #tpu.memory_space<smem>>
    %15 = arith.index_cast %14 : i32 to index
    %c0_17 = arith.constant 0 : index
    %16 = vector.load %arg2[%15, %c0_17] : memref<26x16xf32, #tpu.memory_space<vmem>>, vector<1x16xf32>
    %c0_18 = arith.constant 0 : index
    %c2 = arith.constant 2 : index
    %17 = memref.load %arg1[%c0_18, %c2] : memref<2x8xi32, #tpu.memory_space<smem>>
    %18 = arith.index_cast %17 : i32 to index
    %c0_19 = arith.constant 0 : index
    %19 = vector.load %arg2[%18, %c0_19] : memref<26x16xf32, #tpu.memory_space<vmem>>, vector<1x16xf32>
    %c1_20 = arith.constant 1 : index
    %c2_21 = arith.constant 2 : index
    %20 = memref.load %arg1[%c1_20, %c2_21] : memref<2x8xi32, #tpu.memory_space<smem>>
    %21 = arith.index_cast %20 : i32 to index
    %c0_22 = arith.constant 0 : index
    %22 = vector.load %arg2[%21, %c0_22] : memref<26x16xf32, #tpu.memory_space<vmem>>, vector<1x16xf32>
    %c0_23 = arith.constant 0 : index
    %c3 = arith.constant 3 : index
    %23 = memref.load %arg1[%c0_23, %c3] : memref<2x8xi32, #tpu.memory_space<smem>>
    %24 = arith.index_cast %23 : i32 to index
    %c0_24 = arith.constant 0 : index
    %25 = vector.load %arg2[%24, %c0_24] : memref<26x16xf32, #tpu.memory_space<vmem>>, vector<1x16xf32>
    %c1_25 = arith.constant 1 : index
    %c3_26 = arith.constant 3 : index
    %26 = memref.load %arg1[%c1_25, %c3_26] : memref<2x8xi32, #tpu.memory_space<smem>>
    %27 = arith.index_cast %26 : i32 to index
    %c0_27 = arith.constant 0 : index
    %28 = vector.load %arg2[%27, %c0_27] : memref<26x16xf32, #tpu.memory_space<vmem>>, vector<1x16xf32>
    %c0_28 = arith.constant 0 : index
    %c4 = arith.constant 4 : index
    %29 = memref.load %arg1[%c0_28, %c4] : memref<2x8xi32, #tpu.memory_space<smem>>
    %30 = arith.index_cast %29 : i32 to index
    %c0_29 = arith.constant 0 : index
    %31 = vector.load %arg2[%30, %c0_29] : memref<26x16xf32, #tpu.memory_space<vmem>>, vector<1x16xf32>
    %c1_30 = arith.constant 1 : index
    %c4_31 = arith.constant 4 : index
    %32 = memref.load %arg1[%c1_30, %c4_31] : memref<2x8xi32, #tpu.memory_space<smem>>
    %33 = arith.index_cast %32 : i32 to index
    %c0_32 = arith.constant 0 : index
    %34 = vector.load %arg2[%33, %c0_32] : memref<26x16xf32, #tpu.memory_space<vmem>>, vector<1x16xf32>
    %c0_33 = arith.constant 0 : index
    %c5 = arith.constant 5 : index
    %35 = memref.load %arg1[%c0_33, %c5] : memref<2x8xi32, #tpu.memory_space<smem>>
    %36 = arith.index_cast %35 : i32 to index
    %c0_34 = arith.constant 0 : index
    %37 = vector.load %arg2[%36, %c0_34] : memref<26x16xf32, #tpu.memory_space<vmem>>, vector<1x16xf32>
    %c1_35 = arith.constant 1 : index
    %c5_36 = arith.constant 5 : index
    %38 = memref.load %arg1[%c1_35, %c5_36] : memref<2x8xi32, #tpu.memory_space<smem>>
    %39 = arith.index_cast %38 : i32 to index
    %c0_37 = arith.constant 0 : index
    %40 = vector.load %arg2[%39, %c0_37] : memref<26x16xf32, #tpu.memory_space<vmem>>, vector<1x16xf32>
    %c0_38 = arith.constant 0 : index
    %c6 = arith.constant 6 : index
    %41 = memref.load %arg1[%c0_38, %c6] : memref<2x8xi32, #tpu.memory_space<smem>>
    %42 = arith.index_cast %41 : i32 to index
    %c0_39 = arith.constant 0 : index
    %43 = vector.load %arg2[%42, %c0_39] : memref<26x16xf32, #tpu.memory_space<vmem>>, vector<1x16xf32>
    %c1_40 = arith.constant 1 : index
    %c6_41 = arith.constant 6 : index
    %44 = memref.load %arg1[%c1_40, %c6_41] : memref<2x8xi32, #tpu.memory_space<smem>>
    %45 = arith.index_cast %44 : i32 to index
    %c0_42 = arith.constant 0 : index
    %46 = vector.load %arg2[%45, %c0_42] : memref<26x16xf32, #tpu.memory_space<vmem>>, vector<1x16xf32>
    %c0_43 = arith.constant 0 : index
    %c7 = arith.constant 7 : index
    %47 = memref.load %arg1[%c0_43, %c7] : memref<2x8xi32, #tpu.memory_space<smem>>
    %48 = arith.index_cast %47 : i32 to index
    %c0_44 = arith.constant 0 : index
    %49 = vector.load %arg2[%48, %c0_44] : memref<26x16xf32, #tpu.memory_space<vmem>>, vector<1x16xf32>
    %c1_45 = arith.constant 1 : index
    %c7_46 = arith.constant 7 : index
    %50 = memref.load %arg1[%c1_45, %c7_46] : memref<2x8xi32, #tpu.memory_space<smem>>
    %51 = arith.index_cast %50 : i32 to index
    %c0_47 = arith.constant 0 : index
    %52 = vector.load %arg2[%51, %c0_47] : memref<26x16xf32, #tpu.memory_space<vmem>>, vector<1x16xf32>
    %53 = tpu.concatenate %7, %10, %13, %16, %19, %22, %25, %28, %31, %34, %37, %40, %43, %46, %49, %52 in 0 : vector<1x16xf32>, vector<1x16xf32>, vector<1x16xf32>, vector<1x16xf32>, vector<1x16xf32>, vector<1x16xf32>, vector<1x16xf32>, vector<1x16xf32>, vector<1x16xf32>, vector<1x16xf32>, vector<1x16xf32>, vector<1x16xf32>, vector<1x16xf32>, vector<1x16xf32>, vector<1x16xf32>, vector<1x16xf32> -> vector<16x16xf32>
    %cst = arith.constant dense<0.000000e+00> : vector<16x128xf32>
    %54 = tpu.matmul %53, %0, %cst {dimension_numbers = #tpu.dot_dimension_numbers<[1], [0], [0], [1], [0, 0, 1, 1], [], []>} : vector<16x16xf32>, vector<16x128xf32>, vector<16x128xf32> -> vector<16x128xf32>
    %55 = vector.broadcast %3 : vector<1x128xf32> to vector<16x128xf32>
    %56 = arith.addf %54, %55 : vector<16x128xf32>
    %c0_48 = arith.constant 0 : index
    %c0_49 = arith.constant 0 : index
    %57 = vector.load %arg5[%c0_48, %c0_49] : memref<2x64xf32, #tpu.memory_space<vmem>>, vector<2x32xf32>
    %c0_50 = arith.constant 0 : index
    %c32 = arith.constant 32 : index
    %58 = vector.load %arg5[%c0_50, %c32] : memref<2x64xf32, #tpu.memory_space<vmem>>, vector<2x32xf32>
    %59 = vector.extract_strided_slice %56 {offsets = [0, 0], sizes = [2, 128], strides = [1, 1]} : vector<16x128xf32> to vector<2x128xf32>
    %cst_51 = arith.constant dense<0.000000e+00> : vector<2x128xf32>
    %60 = tpu.matmul %57, %1, %cst_51 {dimension_numbers = #tpu.dot_dimension_numbers<[1], [0], [0], [1], [0, 0, 1, 1], [], []>} : vector<2x32xf32>, vector<32x128xf32>, vector<2x128xf32> -> vector<2x128xf32>
    %61 = arith.addf %59, %60 : vector<2x128xf32>
    %62 = arith.negf %61 : vector<2x128xf32>
    %63 = math.exp %62 : vector<2x128xf32>
    %cst_52 = arith.constant 1.000000e+00 : f32
    %64 = vector.broadcast %cst_52 : f32 to vector<2x128xf32>
    %65 = arith.addf %64, %63 : vector<2x128xf32>
    %66 = arith.divf %64, %65 : vector<2x128xf32>
    %67 = math.tanh %61 : vector<2x128xf32>
    %68 = vector.extract_strided_slice %66 {offsets = [0, 0], sizes = [2, 32], strides = [1, 1]} : vector<2x128xf32> to vector<2x32xf32>
    %69 = vector.extract_strided_slice %66 {offsets = [0, 32], sizes = [2, 32], strides = [1, 1]} : vector<2x128xf32> to vector<2x32xf32>
    %70 = vector.extract_strided_slice %67 {offsets = [0, 64], sizes = [2, 32], strides = [1, 1]} : vector<2x128xf32> to vector<2x32xf32>
    %71 = vector.extract_strided_slice %66 {offsets = [0, 96], sizes = [2, 32], strides = [1, 1]} : vector<2x128xf32> to vector<2x32xf32>
    %72 = arith.mulf %69, %58 : vector<2x32xf32>
    %73 = arith.mulf %68, %70 : vector<2x32xf32>
    %74 = arith.addf %72, %73 : vector<2x32xf32>
    %75 = math.tanh %74 : vector<2x32xf32>
    %76 = arith.mulf %71, %75 : vector<2x32xf32>
    %77 = vector.extract_strided_slice %56 {offsets = [2, 0], sizes = [2, 128], strides = [1, 1]} : vector<16x128xf32> to vector<2x128xf32>
    %cst_53 = arith.constant dense<0.000000e+00> : vector<2x128xf32>
    %78 = tpu.matmul %76, %1, %cst_53 {dimension_numbers = #tpu.dot_dimension_numbers<[1], [0], [0], [1], [0, 0, 1, 1], [], []>} : vector<2x32xf32>, vector<32x128xf32>, vector<2x128xf32> -> vector<2x128xf32>
    %79 = arith.addf %77, %78 : vector<2x128xf32>
    %80 = arith.negf %79 : vector<2x128xf32>
    %81 = math.exp %80 : vector<2x128xf32>
    %cst_54 = arith.constant 1.000000e+00 : f32
    %82 = vector.broadcast %cst_54 : f32 to vector<2x128xf32>
    %83 = arith.addf %82, %81 : vector<2x128xf32>
    %84 = arith.divf %82, %83 : vector<2x128xf32>
    %85 = math.tanh %79 : vector<2x128xf32>
    %86 = vector.extract_strided_slice %84 {offsets = [0, 0], sizes = [2, 32], strides = [1, 1]} : vector<2x128xf32> to vector<2x32xf32>
    %87 = vector.extract_strided_slice %84 {offsets = [0, 32], sizes = [2, 32], strides = [1, 1]} : vector<2x128xf32> to vector<2x32xf32>
    %88 = vector.extract_strided_slice %85 {offsets = [0, 64], sizes = [2, 32], strides = [1, 1]} : vector<2x128xf32> to vector<2x32xf32>
    %89 = vector.extract_strided_slice %84 {offsets = [0, 96], sizes = [2, 32], strides = [1, 1]} : vector<2x128xf32> to vector<2x32xf32>
    %90 = arith.mulf %87, %74 : vector<2x32xf32>
    %91 = arith.mulf %86, %88 : vector<2x32xf32>
    %92 = arith.addf %90, %91 : vector<2x32xf32>
    %93 = math.tanh %92 : vector<2x32xf32>
    %94 = arith.mulf %89, %93 : vector<2x32xf32>
    %95 = vector.extract_strided_slice %56 {offsets = [4, 0], sizes = [2, 128], strides = [1, 1]} : vector<16x128xf32> to vector<2x128xf32>
    %cst_55 = arith.constant dense<0.000000e+00> : vector<2x128xf32>
    %96 = tpu.matmul %94, %1, %cst_55 {dimension_numbers = #tpu.dot_dimension_numbers<[1], [0], [0], [1], [0, 0, 1, 1], [], []>} : vector<2x32xf32>, vector<32x128xf32>, vector<2x128xf32> -> vector<2x128xf32>
    %97 = arith.addf %95, %96 : vector<2x128xf32>
    %98 = arith.negf %97 : vector<2x128xf32>
    %99 = math.exp %98 : vector<2x128xf32>
    %cst_56 = arith.constant 1.000000e+00 : f32
    %100 = vector.broadcast %cst_56 : f32 to vector<2x128xf32>
    %101 = arith.addf %100, %99 : vector<2x128xf32>
    %102 = arith.divf %100, %101 : vector<2x128xf32>
    %103 = math.tanh %97 : vector<2x128xf32>
    %104 = vector.extract_strided_slice %102 {offsets = [0, 0], sizes = [2, 32], strides = [1, 1]} : vector<2x128xf32> to vector<2x32xf32>
    %105 = vector.extract_strided_slice %102 {offsets = [0, 32], sizes = [2, 32], strides = [1, 1]} : vector<2x128xf32> to vector<2x32xf32>
    %106 = vector.extract_strided_slice %103 {offsets = [0, 64], sizes = [2, 32], strides = [1, 1]} : vector<2x128xf32> to vector<2x32xf32>
    %107 = vector.extract_strided_slice %102 {offsets = [0, 96], sizes = [2, 32], strides = [1, 1]} : vector<2x128xf32> to vector<2x32xf32>
    %108 = arith.mulf %105, %92 : vector<2x32xf32>
    %109 = arith.mulf %104, %106 : vector<2x32xf32>
    %110 = arith.addf %108, %109 : vector<2x32xf32>
    %111 = math.tanh %110 : vector<2x32xf32>
    %112 = arith.mulf %107, %111 : vector<2x32xf32>
    %113 = vector.extract_strided_slice %56 {offsets = [6, 0], sizes = [2, 128], strides = [1, 1]} : vector<16x128xf32> to vector<2x128xf32>
    %cst_57 = arith.constant dense<0.000000e+00> : vector<2x128xf32>
    %114 = tpu.matmul %112, %1, %cst_57 {dimension_numbers = #tpu.dot_dimension_numbers<[1], [0], [0], [1], [0, 0, 1, 1], [], []>} : vector<2x32xf32>, vector<32x128xf32>, vector<2x128xf32> -> vector<2x128xf32>
    %115 = arith.addf %113, %114 : vector<2x128xf32>
    %116 = arith.negf %115 : vector<2x128xf32>
    %117 = math.exp %116 : vector<2x128xf32>
    %cst_58 = arith.constant 1.000000e+00 : f32
    %118 = vector.broadcast %cst_58 : f32 to vector<2x128xf32>
    %119 = arith.addf %118, %117 : vector<2x128xf32>
    %120 = arith.divf %118, %119 : vector<2x128xf32>
    %121 = math.tanh %115 : vector<2x128xf32>
    %122 = vector.extract_strided_slice %120 {offsets = [0, 0], sizes = [2, 32], strides = [1, 1]} : vector<2x128xf32> to vector<2x32xf32>
    %123 = vector.extract_strided_slice %120 {offsets = [0, 32], sizes = [2, 32], strides = [1, 1]} : vector<2x128xf32> to vector<2x32xf32>
    %124 = vector.extract_strided_slice %121 {offsets = [0, 64], sizes = [2, 32], strides = [1, 1]} : vector<2x128xf32> to vector<2x32xf32>
    %125 = vector.extract_strided_slice %120 {offsets = [0, 96], sizes = [2, 32], strides = [1, 1]} : vector<2x128xf32> to vector<2x32xf32>
    %126 = arith.mulf %123, %110 : vector<2x32xf32>
    %127 = arith.mulf %122, %124 : vector<2x32xf32>
    %128 = arith.addf %126, %127 : vector<2x32xf32>
    %129 = math.tanh %128 : vector<2x32xf32>
    %130 = arith.mulf %125, %129 : vector<2x32xf32>
    %131 = vector.extract_strided_slice %56 {offsets = [8, 0], sizes = [2, 128], strides = [1, 1]} : vector<16x128xf32> to vector<2x128xf32>
    %cst_59 = arith.constant dense<0.000000e+00> : vector<2x128xf32>
    %132 = tpu.matmul %130, %1, %cst_59 {dimension_numbers = #tpu.dot_dimension_numbers<[1], [0], [0], [1], [0, 0, 1, 1], [], []>} : vector<2x32xf32>, vector<32x128xf32>, vector<2x128xf32> -> vector<2x128xf32>
    %133 = arith.addf %131, %132 : vector<2x128xf32>
    %134 = arith.negf %133 : vector<2x128xf32>
    %135 = math.exp %134 : vector<2x128xf32>
    %cst_60 = arith.constant 1.000000e+00 : f32
    %136 = vector.broadcast %cst_60 : f32 to vector<2x128xf32>
    %137 = arith.addf %136, %135 : vector<2x128xf32>
    %138 = arith.divf %136, %137 : vector<2x128xf32>
    %139 = math.tanh %133 : vector<2x128xf32>
    %140 = vector.extract_strided_slice %138 {offsets = [0, 0], sizes = [2, 32], strides = [1, 1]} : vector<2x128xf32> to vector<2x32xf32>
    %141 = vector.extract_strided_slice %138 {offsets = [0, 32], sizes = [2, 32], strides = [1, 1]} : vector<2x128xf32> to vector<2x32xf32>
    %142 = vector.extract_strided_slice %139 {offsets = [0, 64], sizes = [2, 32], strides = [1, 1]} : vector<2x128xf32> to vector<2x32xf32>
    %143 = vector.extract_strided_slice %138 {offsets = [0, 96], sizes = [2, 32], strides = [1, 1]} : vector<2x128xf32> to vector<2x32xf32>
    %144 = arith.mulf %141, %128 : vector<2x32xf32>
    %145 = arith.mulf %140, %142 : vector<2x32xf32>
    %146 = arith.addf %144, %145 : vector<2x32xf32>
    %147 = math.tanh %146 : vector<2x32xf32>
    %148 = arith.mulf %143, %147 : vector<2x32xf32>
    %149 = vector.extract_strided_slice %56 {offsets = [10, 0], sizes = [2, 128], strides = [1, 1]} : vector<16x128xf32> to vector<2x128xf32>
    %cst_61 = arith.constant dense<0.000000e+00> : vector<2x128xf32>
    %150 = tpu.matmul %148, %1, %cst_61 {dimension_numbers = #tpu.dot_dimension_numbers<[1], [0], [0], [1], [0, 0, 1, 1], [], []>} : vector<2x32xf32>, vector<32x128xf32>, vector<2x128xf32> -> vector<2x128xf32>
    %151 = arith.addf %149, %150 : vector<2x128xf32>
    %152 = arith.negf %151 : vector<2x128xf32>
    %153 = math.exp %152 : vector<2x128xf32>
    %cst_62 = arith.constant 1.000000e+00 : f32
    %154 = vector.broadcast %cst_62 : f32 to vector<2x128xf32>
    %155 = arith.addf %154, %153 : vector<2x128xf32>
    %156 = arith.divf %154, %155 : vector<2x128xf32>
    %157 = math.tanh %151 : vector<2x128xf32>
    %158 = vector.extract_strided_slice %156 {offsets = [0, 0], sizes = [2, 32], strides = [1, 1]} : vector<2x128xf32> to vector<2x32xf32>
    %159 = vector.extract_strided_slice %156 {offsets = [0, 32], sizes = [2, 32], strides = [1, 1]} : vector<2x128xf32> to vector<2x32xf32>
    %160 = vector.extract_strided_slice %157 {offsets = [0, 64], sizes = [2, 32], strides = [1, 1]} : vector<2x128xf32> to vector<2x32xf32>
    %161 = vector.extract_strided_slice %156 {offsets = [0, 96], sizes = [2, 32], strides = [1, 1]} : vector<2x128xf32> to vector<2x32xf32>
    %162 = arith.mulf %159, %146 : vector<2x32xf32>
    %163 = arith.mulf %158, %160 : vector<2x32xf32>
    %164 = arith.addf %162, %163 : vector<2x32xf32>
    %165 = math.tanh %164 : vector<2x32xf32>
    %166 = arith.mulf %161, %165 : vector<2x32xf32>
    %167 = vector.extract_strided_slice %56 {offsets = [12, 0], sizes = [2, 128], strides = [1, 1]} : vector<16x128xf32> to vector<2x128xf32>
    %cst_63 = arith.constant dense<0.000000e+00> : vector<2x128xf32>
    %168 = tpu.matmul %166, %1, %cst_63 {dimension_numbers = #tpu.dot_dimension_numbers<[1], [0], [0], [1], [0, 0, 1, 1], [], []>} : vector<2x32xf32>, vector<32x128xf32>, vector<2x128xf32> -> vector<2x128xf32>
    %169 = arith.addf %167, %168 : vector<2x128xf32>
    %170 = arith.negf %169 : vector<2x128xf32>
    %171 = math.exp %170 : vector<2x128xf32>
    %cst_64 = arith.constant 1.000000e+00 : f32
    %172 = vector.broadcast %cst_64 : f32 to vector<2x128xf32>
    %173 = arith.addf %172, %171 : vector<2x128xf32>
    %174 = arith.divf %172, %173 : vector<2x128xf32>
    %175 = math.tanh %169 : vector<2x128xf32>
    %176 = vector.extract_strided_slice %174 {offsets = [0, 0], sizes = [2, 32], strides = [1, 1]} : vector<2x128xf32> to vector<2x32xf32>
    %177 = vector.extract_strided_slice %174 {offsets = [0, 32], sizes = [2, 32], strides = [1, 1]} : vector<2x128xf32> to vector<2x32xf32>
    %178 = vector.extract_strided_slice %175 {offsets = [0, 64], sizes = [2, 32], strides = [1, 1]} : vector<2x128xf32> to vector<2x32xf32>
    %179 = vector.extract_strided_slice %174 {offsets = [0, 96], sizes = [2, 32], strides = [1, 1]} : vector<2x128xf32> to vector<2x32xf32>
    %180 = arith.mulf %177, %164 : vector<2x32xf32>
    %181 = arith.mulf %176, %178 : vector<2x32xf32>
    %182 = arith.addf %180, %181 : vector<2x32xf32>
    %183 = math.tanh %182 : vector<2x32xf32>
    %184 = arith.mulf %179, %183 : vector<2x32xf32>
    %185 = vector.extract_strided_slice %56 {offsets = [14, 0], sizes = [2, 128], strides = [1, 1]} : vector<16x128xf32> to vector<2x128xf32>
    %cst_65 = arith.constant dense<0.000000e+00> : vector<2x128xf32>
    %186 = tpu.matmul %184, %1, %cst_65 {dimension_numbers = #tpu.dot_dimension_numbers<[1], [0], [0], [1], [0, 0, 1, 1], [], []>} : vector<2x32xf32>, vector<32x128xf32>, vector<2x128xf32> -> vector<2x128xf32>
    %187 = arith.addf %185, %186 : vector<2x128xf32>
    %188 = arith.negf %187 : vector<2x128xf32>
    %189 = math.exp %188 : vector<2x128xf32>
    %cst_66 = arith.constant 1.000000e+00 : f32
    %190 = vector.broadcast %cst_66 : f32 to vector<2x128xf32>
    %191 = arith.addf %190, %189 : vector<2x128xf32>
    %192 = arith.divf %190, %191 : vector<2x128xf32>
    %193 = math.tanh %187 : vector<2x128xf32>
    %194 = vector.extract_strided_slice %192 {offsets = [0, 0], sizes = [2, 32], strides = [1, 1]} : vector<2x128xf32> to vector<2x32xf32>
    %195 = vector.extract_strided_slice %192 {offsets = [0, 32], sizes = [2, 32], strides = [1, 1]} : vector<2x128xf32> to vector<2x32xf32>
    %196 = vector.extract_strided_slice %193 {offsets = [0, 64], sizes = [2, 32], strides = [1, 1]} : vector<2x128xf32> to vector<2x32xf32>
    %197 = vector.extract_strided_slice %192 {offsets = [0, 96], sizes = [2, 32], strides = [1, 1]} : vector<2x128xf32> to vector<2x32xf32>
    %198 = arith.mulf %195, %182 : vector<2x32xf32>
    %199 = arith.mulf %194, %196 : vector<2x32xf32>
    %200 = arith.addf %198, %199 : vector<2x32xf32>
    %201 = math.tanh %200 : vector<2x32xf32>
    %202 = arith.mulf %197, %201 : vector<2x32xf32>
    %203 = tpu.concatenate %202, %200 in 1 : vector<2x32xf32>, vector<2x32xf32> -> vector<2x64xf32>
    %c0_67 = arith.constant 0 : index
    %c0_68 = arith.constant 0 : index
    %204 = vector.load %arg7[%c0_67, %c0_68] : memref<2x64xf32, #tpu.memory_space<vmem>>, vector<2x64xf32>
    tpu.vector_store %arg7[%c0_67, %c0_68], %203 {strides = array<i32>} : memref<2x64xf32, #tpu.memory_space<vmem>>, vector<2x64xf32>,
    %205 = tpu.concatenate %76, %94, %112, %130, %148, %166, %184, %202 in 0 : vector<2x32xf32>, vector<2x32xf32>, vector<2x32xf32>, vector<2x32xf32>, vector<2x32xf32>, vector<2x32xf32>, vector<2x32xf32>, vector<2x32xf32> -> vector<16x32xf32>
    %cst_69 = arith.constant dense<0.000000e+00> : vector<16x128xf32>
    %206 = tpu.matmul %205, %2, %cst_69 {dimension_numbers = #tpu.dot_dimension_numbers<[1], [0], [0], [1], [0, 0, 1, 1], [], []>} : vector<16x32xf32>, vector<32x128xf32>, vector<16x128xf32> -> vector<16x128xf32>
    %207 = vector.broadcast %4 : vector<1x128xf32> to vector<16x128xf32>
    %208 = arith.addf %206, %207 : vector<16x128xf32>
    %209 = vector.extract_strided_slice %208 {offsets = [0, 0], sizes = [2, 128], strides = [1, 1]} : vector<16x128xf32> to vector<2x128xf32>
    %c0_70 = arith.constant 0 : index
    %c0_71 = arith.constant 0 : index
    %210 = vector.load %arg6[%c0_70, %c0_71] : memref<2x1024xf32, #tpu.memory_space<vmem>>, vector<2x128xf32>
    tpu.vector_store %arg6[%c0_70, %c0_71], %209 {strides = array<i32>} : memref<2x1024xf32, #tpu.memory_space<vmem>>, vector<2x128xf32>,
    %211 = vector.extract_strided_slice %208 {offsets = [2, 0], sizes = [2, 128], strides = [1, 1]} : vector<16x128xf32> to vector<2x128xf32>
    %c0_72 = arith.constant 0 : index
    %c128 = arith.constant 128 : index
    %212 = vector.load %arg6[%c0_72, %c128] : memref<2x1024xf32, #tpu.memory_space<vmem>>, vector<2x128xf32>
    tpu.vector_store %arg6[%c0_72, %c128], %211 {strides = array<i32>} : memref<2x1024xf32, #tpu.memory_space<vmem>>, vector<2x128xf32>,
    %213 = vector.extract_strided_slice %208 {offsets = [4, 0], sizes = [2, 128], strides = [1, 1]} : vector<16x128xf32> to vector<2x128xf32>
    %c0_73 = arith.constant 0 : index
    %c256 = arith.constant 256 : index
    %214 = vector.load %arg6[%c0_73, %c256] : memref<2x1024xf32, #tpu.memory_space<vmem>>, vector<2x128xf32>
    tpu.vector_store %arg6[%c0_73, %c256], %213 {strides = array<i32>} : memref<2x1024xf32, #tpu.memory_space<vmem>>, vector<2x128xf32>,
    %215 = vector.extract_strided_slice %208 {offsets = [6, 0], sizes = [2, 128], strides = [1, 1]} : vector<16x128xf32> to vector<2x128xf32>
    %c0_74 = arith.constant 0 : index
    %c384 = arith.constant 384 : index
    %216 = vector.load %arg6[%c0_74, %c384] : memref<2x1024xf32, #tpu.memory_space<vmem>>, vector<2x128xf32>
    tpu.vector_store %arg6[%c0_74, %c384], %215 {strides = array<i32>} : memref<2x1024xf32, #tpu.memory_space<vmem>>, vector<2x128xf32>,
    %217 = vector.extract_strided_slice %208 {offsets = [8, 0], sizes = [2, 128], strides = [1, 1]} : vector<16x128xf32> to vector<2x128xf32>
    %c0_75 = arith.constant 0 : index
    %c512 = arith.constant 512 : index
    %218 = vector.load %arg6[%c0_75, %c512] : memref<2x1024xf32, #tpu.memory_space<vmem>>, vector<2x128xf32>
    tpu.vector_store %arg6[%c0_75, %c512], %217 {strides = array<i32>} : memref<2x1024xf32, #tpu.memory_space<vmem>>, vector<2x128xf32>,
    %219 = vector.extract_strided_slice %208 {offsets = [10, 0], sizes = [2, 128], strides = [1, 1]} : vector<16x128xf32> to vector<2x128xf32>
    %c0_76 = arith.constant 0 : index
    %c640 = arith.constant 640 : index
    %220 = vector.load %arg6[%c0_76, %c640] : memref<2x1024xf32, #tpu.memory_space<vmem>>, vector<2x128xf32>
    tpu.vector_store %arg6[%c0_76, %c640], %219 {strides = array<i32>} : memref<2x1024xf32, #tpu.memory_space<vmem>>, vector<2x128xf32>,
    %221 = vector.extract_strided_slice %208 {offsets = [12, 0], sizes = [2, 128], strides = [1, 1]} : vector<16x128xf32> to vector<2x128xf32>
    %c0_77 = arith.constant 0 : index
    %c768 = arith.constant 768 : index
    %222 = vector.load %arg6[%c0_77, %c768] : memref<2x1024xf32, #tpu.memory_space<vmem>>, vector<2x128xf32>
    tpu.vector_store %arg6[%c0_77, %c768], %221 {strides = array<i32>} : memref<2x1024xf32, #tpu.memory_space<vmem>>, vector<2x128xf32>,
    %223 = vector.extract_strided_slice %208 {offsets = [14, 0], sizes = [2, 128], strides = [1, 1]} : vector<16x128xf32> to vector<2x128xf32>
    %c0_78 = arith.constant 0 : index
    %c896 = arith.constant 896 : index
    %224 = vector.load %arg6[%c0_78, %c896] : memref<2x1024xf32, #tpu.memory_space<vmem>>, vector<2x128xf32>
    tpu.vector_store %arg6[%c0_78, %c896], %223 {strides = array<i32>} : memref<2x1024xf32, #tpu.memory_space<vmem>>, vector<2x128xf32>,
    return
  }
  func.func @transform_0(%arg0: i32, %arg1: memref<2x8xi32, #tpu.memory_space<smem>>) -> (i32, i32) {
    %c0_i32 = arith.constant 0 : i32
    %c0_i32_0 = arith.constant 0 : i32
    %c0_i32_1 = arith.constant 0 : i32
    return %c0_i32, %c0_i32_0 : i32, i32
  }
  func.func @transform_1(%arg0: i32, %arg1: memref<2x8xi32, #tpu.memory_space<smem>>) -> (i32, i32) {
    %c0_i32 = arith.constant 0 : i32
    %c0_i32_0 = arith.constant 0 : i32
    %c0_i32_1 = arith.constant 0 : i32
    return %c0_i32, %c0_i32_0 : i32, i32
  }
  func.func @transform_2(%arg0: i32, %arg1: memref<2x8xi32, #tpu.memory_space<smem>>) -> (i32, i32) {
    %c0_i32 = arith.constant 0 : i32
    %c0_i32_0 = arith.constant 0 : i32
    %c0_i32_1 = arith.constant 0 : i32
    return %c0_i32, %c0_i32_0 : i32, i32
  }
  func.func @transform_3(%arg0: i32, %arg1: memref<2x8xi32, #tpu.memory_space<smem>>) -> (i32, i32) {
    %c0_i32 = arith.constant 0 : i32
    %c0_i32_0 = arith.constant 0 : i32
    %c0_i32_1 = arith.constant 0 : i32
    return %c0_i32, %c0_i32_0 : i32, i32
  }
  func.func @transform_4(%arg0: i32, %arg1: memref<2x8xi32, #tpu.memory_space<smem>>) -> (i32, i32) {
    %c0_i32 = arith.constant 0 : i32
    %c0_i32_0 = arith.constant 0 : i32
    %c0_i32_1 = arith.constant 0 : i32
    return %c0_i32, %c0_i32_0 : i32, i32
  }
  func.func @transform_5(%arg0: i32, %arg1: memref<2x8xi32, #tpu.memory_space<smem>>) -> (i32, i32) {
    %c0_i32 = arith.constant 0 : i32
    %c0_i32_0 = arith.constant 0 : i32
    %c0_i32_1 = arith.constant 0 : i32
    return %c0_i32, %c0_i32_0 : i32, i32
  }
}

</mosaic_0001>

<llo_original>
// kernel: simple_lstm_forward.1
$region0: #{simple_lstm_forward.1}
  #allocation0 [shape = 'u32[]', space=smem, size = 0x4, offset = 0x4, fixed_abs, tag = 'smem constant byte address 0x4 - core index']
  #allocation1 [shape = 'u32[144,128]{1,0:T(1,128)}', space=vmem, size = 0x12000, scoped, tag = 'internal scratch']
  #allocation2 [shape = 's32[1]{0}', space=sflag, size = 0x4, scoped, tag = 'scoped memory for simple_lstm_forward.1']
  #allocation3 [shape = 'u8[1024]{0}', space=smem, size = 0x400, scoped, tag = 'prefetched SMEM operand 0']
  %s0 = inlined_call_operand.vmem [shape: s32[2,8], index: 0, kind: input, shape index: {}]
  %s1 = inlined_call_operand.vmem [shape: f32[26,16], index: 1, kind: input, shape index: {}]
  %s2 = inlined_call_operand.vmem [shape: f32[80,128], index: 2, kind: input, shape index: {}]
  %s3 = inlined_call_operand.vmem [shape: f32[2,128], index: 3, kind: input, shape index: {}]
  %s4 = inlined_call_operand.vmem [shape: f32[2,64], index: 4, kind: input, shape index: {}]
  %s5 = inlined_call_operand.vmem [shape: f32[2,1024], index: 5, kind: output, shape index: {0}]
  %s6 = inlined_call_operand.vmem [shape: f32[2,64], index: 6, kind: output, shape index: {1}]
  %7 = xla_tuple %s5, %s6
  %s8 = sld [smem:[#allocation0]]
  $region34: #{simple_lstm_forward.1} parent=0
    _
  %s10 = ssub.s32 1, %s8
  %s11 = scalar_select 0, %s10, %s8
  %s12 = sshll.u32 %s0, 4
  %s13 = int_to_ptr.vmem [resolvable:$true] %s12
  %15 = dma.vmem_to_smem %s13, 32, [#allocation3], [#allocation2]
  %16 = dma.done [#allocation2], 32
  %17 = sfence
  // Predicated region
  $region2: #{simple_lstm_forward.1} parent=0 // pred_check
    _
  $region3: #{simple_lstm_forward.1} parent=0 // pred_check_branch
    %19 = sbr.rel (0) target = $region5
  $region4: #{simple_lstm_forward.1} parent=0 // pred_region
    _
  $region5: #{simple_lstm_forward.1} parent=0 // pred_fallthru
    _
  // Predicated region
  $region6: #{simple_lstm_forward.1} parent=0 // pred_check
    _
  $region7: #{simple_lstm_forward.1} parent=0 // pred_check_branch
    %21 = sbr.rel (0) target = $region9
  $region8: #{simple_lstm_forward.1} parent=0 // pred_region
    _
  $region9: #{simple_lstm_forward.1} parent=0 // pred_fallthru
    _
  // Predicated region
  $region10: #{simple_lstm_forward.1} parent=0 // pred_check
    _
  $region11: #{simple_lstm_forward.1} parent=0 // pred_check_branch
    %23 = sbr.rel (0) target = $region13
  $region12: #{simple_lstm_forward.1} parent=0 // pred_region
    _
  $region13: #{simple_lstm_forward.1} parent=0 // pred_fallthru
    _
  // Predicated region
  $region14: #{simple_lstm_forward.1} parent=0 // pred_check
    _
  $region15: #{simple_lstm_forward.1} parent=0 // pred_check_branch
    %25 = sbr.rel (0) target = $region17
  $region16: #{simple_lstm_forward.1} parent=0 // pred_region
    _
  $region17: #{simple_lstm_forward.1} parent=0 // pred_fallthru
    _
  %v26 = vld [vmem:[%s2] sm:$0xff]
  %v27 = vld [vmem:[%s2 + $0x8] sm:$0xff]
  %v28 = vld [vmem:[%s2 + $0x10] sm:$0xff]
  %v29 = vld [vmem:[%s2 + $0x18] sm:$0xff]
  %v30 = vld [vmem:[%s2 + $0x20] sm:$0xff]
  %v31 = vld [vmem:[%s2 + $0x28] sm:$0xff]
  %v32 = vld [vmem:[%s2 + $0x30] sm:$0xff]
  %v33 = vld [vmem:[%s2 + $0x38] sm:$0xff]
  %v34 = vld [vmem:[%s2 + $0x40] sm:$0xff]
  %v35 = vld [vmem:[%s2 + $0x48] sm:$0xff]
  %v36 = vld [vmem:[%s3] sm:$0x1]
  %v37 = vld [vmem:[%s3 + $0x1] sm:$0x1]
  %s38 = sld [smem:[#allocation3]]
  %s39 = scalar_lea.vmem %s1, %s38
  %v40 = vld [vmem:[%s39] sm:$0x1]
  %s41 = sld [smem:[#allocation3 + $0x80]]
  %s42 = scalar_lea.vmem %s1, %s41
  %v43 = vld [vmem:[%s42] sm:$0x1]
  %s44 = sld [smem:[#allocation3 + $0x1]]
  %s45 = scalar_lea.vmem %s1, %s44
  %v46 = vld [vmem:[%s45] sm:$0x1]
  %s47 = sld [smem:[#allocation3 + $0x81]]
  %s48 = scalar_lea.vmem %s1, %s47
  %v49 = vld [vmem:[%s48] sm:$0x1]
  %s50 = sld [smem:[#allocation3 + $0x2]]
  %s51 = scalar_lea.vmem %s1, %s50
  %v52 = vld [vmem:[%s51] sm:$0x1]
  %s53 = sld [smem:[#allocation3 + $0x82]]
  %s54 = scalar_lea.vmem %s1, %s53
  %v55 = vld [vmem:[%s54] sm:$0x1]
  %s56 = sld [smem:[#allocation3 + $0x3]]
  %s57 = scalar_lea.vmem %s1, %s56
  %v58 = vld [vmem:[%s57] sm:$0x1]
  %s59 = sld [smem:[#allocation3 + $0x83]]
  %s60 = scalar_lea.vmem %s1, %s59
  %v61 = vld [vmem:[%s60] sm:$0x1]
  %s62 = sld [smem:[#allocation3 + $0x4]]
  %s63 = scalar_lea.vmem %s1, %s62
  %v64 = vld [vmem:[%s63] sm:$0x1]
  %s65 = sld [smem:[#allocation3 + $0x84]]
  %s66 = scalar_lea.vmem %s1, %s65
  %v67 = vld [vmem:[%s66] sm:$0x1]
  %s68 = sld [smem:[#allocation3 + $0x5]]
  %s69 = scalar_lea.vmem %s1, %s68
  %v70 = vld [vmem:[%s69] sm:$0x1]
  %s71 = sld [smem:[#allocation3 + $0x85]]
  %s72 = scalar_lea.vmem %s1, %s71
  %v73 = vld [vmem:[%s72] sm:$0x1]
  %s74 = sld [smem:[#allocation3 + $0x6]]
  %s75 = scalar_lea.vmem %s1, %s74
  %v76 = vld [vmem:[%s75] sm:$0x1]
  %s77 = sld [smem:[#allocation3 + $0x86]]
  %s78 = scalar_lea.vmem %s1, %s77
  %v79 = vld [vmem:[%s78] sm:$0x1]
  %s80 = sld [smem:[#allocation3 + $0x7]]
  %s81 = scalar_lea.vmem %s1, %s80
  %v82 = vld [vmem:[%s81] sm:$0x1]
  %s83 = sld [smem:[#allocation3 + $0x87]]
  %s84 = scalar_lea.vmem %s1, %s83
  %v85 = vld [vmem:[%s84] sm:$0x1]
  %v87 = vrot.slane %v43, 7
  %v90 = vrot.slane %v46, 6
  %v93 = vrot.slane %v49, 5
  %v96 = vrot.slane %v52, 4
  %v99 = vrot.slane %v55, 3
  %v102 = vrot.slane %v58, 2
  %v105 = vrot.slane %v61, 1
  %v108 = vrot.slane %v67, 7
  %v111 = vrot.slane %v70, 6
  %v114 = vrot.slane %v73, 5
  %v117 = vrot.slane %v76, 4
  %v120 = vrot.slane %v79, 3
  %v123 = vrot.slane %v82, 2
  %v126 = vrot.slane %v85, 1
  %vm128 = vcmask 1040384
  %v129 = vsel %vm128, %v40, %v87
  %vm130 = vcmask 1041408
  %v131 = vsel %vm130, %v129, %v90
  %vm132 = vcmask 1042432
  %v133 = vsel %vm132, %v131, %v93
  %vm134 = vcmask 1043456
  %v135 = vsel %vm134, %v133, %v96
  %vm136 = vcmask 1044480
  %v137 = vsel %vm136, %v135, %v99
  %vm138 = vcmask 1045504
  %v139 = vsel %vm138, %v137, %v102
  %vm140 = vcmask 1046528
  %v141 = vsel %vm140, %v139, %v105
  %v142 = vsel %vm128, %v64, %v108
  %v143 = vsel %vm130, %v142, %v111
  %v144 = vsel %vm132, %v143, %v114
  %v145 = vsel %vm134, %v144, %v117
  %v146 = vsel %vm136, %v145, %v120
  %v147 = vsel %vm138, %v146, %v123
  %v148 = vsel %vm140, %v147, %v126
  %v149 = vlaneseq
  %v150 = vshrl.u32 %v149, 7
  %v151 = vsub.s32 0, %v150
  %v152 = vrot.slane %v36, %v151
  %vm153 = vcmask 130048
  %v155 = vsel %vm153, %v141, 0
  %v158 = vsel %vm153, %v148, 0
  %160 = vmatprep.subr.mxu0 0.0
  %161 = vmatpush1.msra.mxu0 %v26
  %162 = vmatprep.subr.mxu0 0.0
  %163 = vmatpush1.msra.mxu0 %v27
  %164 = vmatprep.subr.mxu0 0.0
  %165 = vmatpush1.msra.mxu0 0.0
  %166 = vmatprep.subr.mxu0 0.0
  %167 = vmatpush1.msra.mxu0 0.0
  %168 = vmatprep.subr.mxu0 0.0
  %169 = vmatpush1.msra.mxu0 0.0
  %170 = vmatprep.subr.mxu0 0.0
  %171 = vmatpush1.msra.mxu0 0.0
  %172 = vmatprep.subr.mxu0 0.0
  %173 = vmatpush1.msra.mxu0 0.0
  %174 = vmatprep.subr.mxu0 0.0
  %175 = vmatpush1.msra.mxu0 0.0
  %176 = vmatprep.subr.mxu0 0.0
  %177 = vmatpush1.msra.mxu0 0.0
  %178 = vmatprep.subr.mxu0 0.0
  %179 = vmatpush1.msra.mxu0 0.0
  %180 = vmatprep.subr.mxu0 0.0
  %181 = vmatpush1.msra.mxu0 0.0
  %182 = vmatprep.subr.mxu0 0.0
  %183 = vmatpush1.msra.mxu0 0.0
  %184 = vmatprep.subr.mxu0 0.0
  %185 = vmatpush1.msra.mxu0 0.0
  %186 = vmatprep.subr.mxu0 0.0
  %187 = vmatpush1.msra.mxu0 0.0
  %188 = vmatprep.subr.mxu0 0.0
  %189 = vmatpush1.msra.mxu0 0.0
  %190 = vmatprep.subr.mxu0 0.0
  %191 = vmatpush1.msra.mxu0 0.0
  %192 = vmatprep.subr.mxu0 0.0
  %193 = vmatpush1.msra.mxu0 0.0
  %194 = vmatprep.subr.mxu0 0.0
  %195 = vmatpush1.msra.mxu0 0.0
  %196 = vmatprep.subr.mxu0 0.0
  %197 = vmatpush1.msra.mxu0 0.0
  %198 = vmatprep.subr.mxu0 0.0
  %199 = vmatpush1.msra.mxu0 0.0
  %200 = vmatprep.subr.mxu0 0.0
  %201 = vmatpush1.msra.mxu0 0.0
  %202 = vmatprep.subr.mxu0 0.0
  %203 = vmatpush1.msra.mxu0 0.0
  %204 = vmatprep.subr.mxu0 0.0
  %205 = vmatpush1.msra.mxu0 0.0
  %206 = vmatprep.subr.mxu0 0.0
  %207 = vmatpush1.msra.mxu0 0.0
  %208 = vmatprep.subr.mxu0 0.0
  %209 = vmatpush1.msra.mxu0 0.0
  %210 = vmatprep.subr.mxu0 0.0
  %211 = vmatpush1.msra.mxu0 0.0
  %212 = vmatprep.subr.mxu0 0.0
  %213 = vmatpush1.msra.mxu0 0.0
  %214 = vmatprep.subr.mxu0 0.0
  %215 = vmatpush1.msra.mxu0 0.0
  %216 = vmatprep.subr.mxu0 0.0
  %217 = vmatpush1.msra.mxu0 0.0
  %218 = vmatprep.subr.mxu0 0.0
  %219 = vmatpush1.msra.mxu0 0.0
  %220 = vmatprep.subr.mxu0 0.0
  %221 = vmatpush1.msra.mxu0 0.0
  %222 = vmatprep.subr.mxu0 0.0
  %223 = vmatpush1.msra.mxu0 0.0
  %224 = vmatprep.mubr.f32.mxu0 0.0
  %225 = vmatmul.mubr.f32.gmra.mrb[0].mxu0 %v155
  %v226 = vpop.f32.mrb[0].mxu0
  %v227 = vadd.f32 %v152, %v226
  %v228 = vpop.f32.mrb[0].mxu0
  %229 = vmatprep.mubr.f32.mxu0 0.0
  %230 = vmatmul.mubr.f32.gmra.mrb[0].mxu0 %v158
  %v231 = vpop.f32.mrb[0].mxu0
  %v232 = vadd.f32 %v152, %v231
  %v233 = vpop.f32.mrb[0].mxu0
  %234 = vdwg.mxu0
  %v235 = vld [vmem:[%s4] sm:$0x3]
  %vm236 = vcmask 261120
  %v238 = vsel %vm236, %v235, 0
  %240 = vmatprep.subr.mxu0 0.0
  %241 = vmatpush1.msra.mxu0 %v28
  %242 = vmatprep.subr.mxu0 0.0
  %243 = vmatpush1.msra.mxu0 %v29
  %244 = vmatprep.subr.mxu0 0.0
  %245 = vmatpush1.msra.mxu0 %v30
  %246 = vmatprep.subr.mxu0 0.0
  %247 = vmatpush1.msra.mxu0 %v31
  %248 = vmatprep.subr.mxu0 0.0
  %249 = vmatpush1.msra.mxu0 0.0
  %250 = vmatprep.subr.mxu0 0.0
  %251 = vmatpush1.msra.mxu0 0.0
  %252 = vmatprep.subr.mxu0 0.0
  %253 = vmatpush1.msra.mxu0 0.0
  %254 = vmatprep.subr.mxu0 0.0
  %255 = vmatpush1.msra.mxu0 0.0
  %256 = vmatprep.subr.mxu0 0.0
  %257 = vmatpush1.msra.mxu0 0.0
  %258 = vmatprep.subr.mxu0 0.0
  %259 = vmatpush1.msra.mxu0 0.0
  %260 = vmatprep.subr.mxu0 0.0
  %261 = vmatpush1.msra.mxu0 0.0
  %262 = vmatprep.subr.mxu0 0.0
  %263 = vmatpush1.msra.mxu0 0.0
  %264 = vmatprep.subr.mxu0 0.0
  %265 = vmatpush1.msra.mxu0 0.0
  %266 = vmatprep.subr.mxu0 0.0
  %267 = vmatpush1.msra.mxu0 0.0
  %268 = vmatprep.subr.mxu0 0.0
  %269 = vmatpush1.msra.mxu0 0.0
  %270 = vmatprep.subr.mxu0 0.0
  %271 = vmatpush1.msra.mxu0 0.0
  %272 = vmatprep.subr.mxu0 0.0
  %273 = vmatpush1.msra.mxu0 0.0
  %274 = vmatprep.subr.mxu0 0.0
  %275 = vmatpush1.msra.mxu0 0.0
  %276 = vmatprep.subr.mxu0 0.0
  %277 = vmatpush1.msra.mxu0 0.0
  %278 = vmatprep.subr.mxu0 0.0
  %279 = vmatpush1.msra.mxu0 0.0
  %280 = vmatprep.subr.mxu0 0.0
  %281 = vmatpush1.msra.mxu0 0.0
  %282 = vmatprep.subr.mxu0 0.0
  %283 = vmatpush1.msra.mxu0 0.0
  %284 = vmatprep.subr.mxu0 0.0
  %285 = vmatpush1.msra.mxu0 0.0
  %286 = vmatprep.subr.mxu0 0.0
  %287 = vmatpush1.msra.mxu0 0.0
  %288 = vmatprep.subr.mxu0 0.0
  %289 = vmatpush1.msra.mxu0 0.0
  %290 = vmatprep.subr.mxu0 0.0
  %291 = vmatpush1.msra.mxu0 0.0
  %292 = vmatprep.subr.mxu0 0.0
  %293 = vmatpush1.msra.mxu0 0.0
  %294 = vmatprep.subr.mxu0 0.0
  %295 = vmatpush1.msra.mxu0 0.0
  %296 = vmatprep.subr.mxu0 0.0
  %297 = vmatpush1.msra.mxu0 0.0
  %298 = vmatprep.subr.mxu0 0.0
  %299 = vmatpush1.msra.mxu0 0.0
  %300 = vmatprep.subr.mxu0 0.0
  %301 = vmatpush1.msra.mxu0 0.0
  %302 = vmatprep.subr.mxu0 0.0
  %303 = vmatpush1.msra.mxu0 0.0
  %304 = vmatprep.mubr.f32.mxu0 0.0
  %305 = vmatmul.mubr.f32.gmra.mrb[0].mxu0 %v238
  %v306 = vpop.f32.mrb[0].mxu0
  %v307 = vadd.f32 0.0, %v306
  %v308 = vpop.f32.mrb[0].mxu0
  %309 = vdwg.mxu0
  %v310 = vadd.f32 %v227, %v307
  %v311 = vxor.u32 %v310, 2147483648
  %v312 = vmul.f32 %v311, 1.442695
  %v313 = vpow.pop %v312
  %v314 = vadd.f32 %v313, 1.0
  %v315 = vrcp.pop %v314
  %v316 = vmul.f32 1.0, %v315
  %v317 = vtanh.pop %v310
  %v318 = vmul.f32 %v316, %v235
  %320 = vrot.lane.b32.xlu0 %v317, 64
  %v321 = vpop.permute.xlu0 %320
  %v323 = vmul.f32 %v316, %v321
  %325 = vrot.lane.b32.xlu0 %v323, 32
  %v326 = vpop.permute.xlu0 %325
  %v328 = vadd.f32 %v318, %v326
  %v329 = vtanh.pop %v328
  %331 = vrot.lane.b32.xlu0 %v329, 64
  %v332 = vpop.permute.xlu0 %331
  %v334 = vmul.f32 %v316, %v332
  %336 = vrot.lane.b32.xlu0 %v334, 32
  %v337 = vpop.permute.xlu0 %336
  %v338 = vsel %vm236, %v337, 0
  %340 = vmatprep.subr.mxu0 0.0
  %341 = vmatpush1.msra.mxu0 %v28
  %342 = vmatprep.subr.mxu0 0.0
  %343 = vmatpush1.msra.mxu0 %v29
  %344 = vmatprep.subr.mxu0 0.0
  %345 = vmatpush1.msra.mxu0 %v30
  %346 = vmatprep.subr.mxu0 0.0
  %347 = vmatpush1.msra.mxu0 %v31
  %348 = vmatprep.subr.mxu0 0.0
  %349 = vmatpush1.msra.mxu0 0.0
  %350 = vmatprep.subr.mxu0 0.0
  %351 = vmatpush1.msra.mxu0 0.0
  %352 = vmatprep.subr.mxu0 0.0
  %353 = vmatpush1.msra.mxu0 0.0
  %354 = vmatprep.subr.mxu0 0.0
  %355 = vmatpush1.msra.mxu0 0.0
  %356 = vmatprep.subr.mxu0 0.0
  %357 = vmatpush1.msra.mxu0 0.0
  %358 = vmatprep.subr.mxu0 0.0
  %359 = vmatpush1.msra.mxu0 0.0
  %360 = vmatprep.subr.mxu0 0.0
  %361 = vmatpush1.msra.mxu0 0.0
  %362 = vmatprep.subr.mxu0 0.0
  %363 = vmatpush1.msra.mxu0 0.0
  %364 = vmatprep.subr.mxu0 0.0
  %365 = vmatpush1.msra.mxu0 0.0
  %366 = vmatprep.subr.mxu0 0.0
  %367 = vmatpush1.msra.mxu0 0.0
  %368 = vmatprep.subr.mxu0 0.0
  %369 = vmatpush1.msra.mxu0 0.0
  %370 = vmatprep.subr.mxu0 0.0
  %371 = vmatpush1.msra.mxu0 0.0
  %372 = vmatprep.subr.mxu0 0.0
  %373 = vmatpush1.msra.mxu0 0.0
  %374 = vmatprep.subr.mxu0 0.0
  %375 = vmatpush1.msra.mxu0 0.0
  %376 = vmatprep.subr.mxu0 0.0
  %377 = vmatpush1.msra.mxu0 0.0
  %378 = vmatprep.subr.mxu0 0.0
  %379 = vmatpush1.msra.mxu0 0.0
  %380 = vmatprep.subr.mxu0 0.0
  %381 = vmatpush1.msra.mxu0 0.0
  %382 = vmatprep.subr.mxu0 0.0
  %383 = vmatpush1.msra.mxu0 0.0
  %384 = vmatprep.subr.mxu0 0.0
  %385 = vmatpush1.msra.mxu0 0.0
  %386 = vmatprep.subr.mxu0 0.0
  %387 = vmatpush1.msra.mxu0 0.0
  %388 = vmatprep.subr.mxu0 0.0
  %389 = vmatpush1.msra.mxu0 0.0
  %390 = vmatprep.subr.mxu0 0.0
  %391 = vmatpush1.msra.mxu0 0.0
  %392 = vmatprep.subr.mxu0 0.0
  %393 = vmatpush1.msra.mxu0 0.0
  %394 = vmatprep.subr.mxu0 0.0
  %395 = vmatpush1.msra.mxu0 0.0
  %396 = vmatprep.subr.mxu0 0.0
  %397 = vmatpush1.msra.mxu0 0.0
  %398 = vmatprep.subr.mxu0 0.0
  %399 = vmatpush1.msra.mxu0 0.0
  %400 = vmatprep.subr.mxu0 0.0
  %401 = vmatpush1.msra.mxu0 0.0
  %402 = vmatprep.subr.mxu0 0.0
  %403 = vmatpush1.msra.mxu0 0.0
  %404 = vmatprep.mubr.f32.mxu0 0.0
  %405 = vmatmul.mubr.f32.gmra.mrb[0].mxu0 %v338
  %v406 = vpop.f32.mrb[0].mxu0
  %v407 = vadd.f32 0.0, %v406
  %v408 = vpop.f32.mrb[0].mxu0
  %409 = vdwg.mxu0
  %v411 = vrot.slane %v407, 6
  %v413 = vadd.f32 %v227, %v411
  %v414 = vxor.u32 %v413, 2147483648
  %v415 = vmul.f32 %v414, 1.442695
  %v416 = vpow.pop %v415
  %v417 = vadd.f32 %v416, 1.0
  %v418 = vrcp.pop %v417
  %v419 = vmul.f32 1.0, %v418
  %v420 = vtanh.pop %v413
  %v422 = vrot.slane %v328, 6
  %v424 = vmul.f32 %v419, %v422
  %426 = vrot.lane.b32.xlu0 %v420, 64
  %v427 = vpop.permute.xlu0 %426
  %v429 = vmul.f32 %v419, %v427
  %431 = vrot.lane.b32.xlu0 %v429, 32
  %v432 = vpop.permute.xlu0 %431
  %v434 = vadd.f32 %v424, %v432
  %v435 = vtanh.pop %v434
  %437 = vrot.lane.b32.xlu0 %v435, 64
  %v438 = vpop.permute.xlu0 %437
  %v440 = vmul.f32 %v419, %v438
  %v442 = vrot.slane %v440, 2
  %443 = vrot.lane.b32.xlu0 %v442, 32
  %v444 = vpop.permute.xlu0 %443
  %v445 = vsel %vm236, %v444, 0
  %447 = vmatprep.subr.mxu0 0.0
  %448 = vmatpush1.msra.mxu0 %v28
  %449 = vmatprep.subr.mxu0 0.0
  %450 = vmatpush1.msra.mxu0 %v29
  %451 = vmatprep.subr.mxu0 0.0
  %452 = vmatpush1.msra.mxu0 %v30
  %453 = vmatprep.subr.mxu0 0.0
  %454 = vmatpush1.msra.mxu0 %v31
  %455 = vmatprep.subr.mxu0 0.0
  %456 = vmatpush1.msra.mxu0 0.0
  %457 = vmatprep.subr.mxu0 0.0
  %458 = vmatpush1.msra.mxu0 0.0
  %459 = vmatprep.subr.mxu0 0.0
  %460 = vmatpush1.msra.mxu0 0.0
  %461 = vmatprep.subr.mxu0 0.0
  %462 = vmatpush1.msra.mxu0 0.0
  %463 = vmatprep.subr.mxu0 0.0
  %464 = vmatpush1.msra.mxu0 0.0
  %465 = vmatprep.subr.mxu0 0.0
  %466 = vmatpush1.msra.mxu0 0.0
  %467 = vmatprep.subr.mxu0 0.0
  %468 = vmatpush1.msra.mxu0 0.0
  %469 = vmatprep.subr.mxu0 0.0
  %470 = vmatpush1.msra.mxu0 0.0
  %471 = vmatprep.subr.mxu0 0.0
  %472 = vmatpush1.msra.mxu0 0.0
  %473 = vmatprep.subr.mxu0 0.0
  %474 = vmatpush1.msra.mxu0 0.0
  %475 = vmatprep.subr.mxu0 0.0
  %476 = vmatpush1.msra.mxu0 0.0
  %477 = vmatprep.subr.mxu0 0.0
  %478 = vmatpush1.msra.mxu0 0.0
  %479 = vmatprep.subr.mxu0 0.0
  %480 = vmatpush1.msra.mxu0 0.0
  %481 = vmatprep.subr.mxu0 0.0
  %482 = vmatpush1.msra.mxu0 0.0
  %483 = vmatprep.subr.mxu0 0.0
  %484 = vmatpush1.msra.mxu0 0.0
  %485 = vmatprep.subr.mxu0 0.0
  %486 = vmatpush1.msra.mxu0 0.0
  %487 = vmatprep.subr.mxu0 0.0
  %488 = vmatpush1.msra.mxu0 0.0
  %489 = vmatprep.subr.mxu0 0.0
  %490 = vmatpush1.msra.mxu0 0.0
  %491 = vmatprep.subr.mxu0 0.0
  %492 = vmatpush1.msra.mxu0 0.0
  %493 = vmatprep.subr.mxu0 0.0
  %494 = vmatpush1.msra.mxu0 0.0
  %495 = vmatprep.subr.mxu0 0.0
  %496 = vmatpush1.msra.mxu0 0.0
  %497 = vmatprep.subr.mxu0 0.0
  %498 = vmatpush1.msra.mxu0 0.0
  %499 = vmatprep.subr.mxu0 0.0
  %500 = vmatpush1.msra.mxu0 0.0
  %501 = vmatprep.subr.mxu0 0.0
  %502 = vmatpush1.msra.mxu0 0.0
  %503 = vmatprep.subr.mxu0 0.0
  %504 = vmatpush1.msra.mxu0 0.0
  %505 = vmatprep.subr.mxu0 0.0
  %506 = vmatpush1.msra.mxu0 0.0
  %507 = vmatprep.subr.mxu0 0.0
  %508 = vmatpush1.msra.mxu0 0.0
  %509 = vmatprep.subr.mxu0 0.0
  %510 = vmatpush1.msra.mxu0 0.0
  %511 = vmatprep.mubr.f32.mxu0 0.0
  %512 = vmatmul.mubr.f32.gmra.mrb[0].mxu0 %v445
  %v513 = vpop.f32.mrb[0].mxu0
  %v514 = vadd.f32 0.0, %v513
  %v515 = vpop.f32.mrb[0].mxu0
  %516 = vdwg.mxu0
  %v518 = vrot.slane %v514, 4
  %v520 = vadd.f32 %v227, %v518
  %v521 = vxor.u32 %v520, 2147483648
  %v522 = vmul.f32 %v521, 1.442695
  %v523 = vpow.pop %v522
  %v524 = vadd.f32 %v523, 1.0
  %v525 = vrcp.pop %v524
  %v526 = vmul.f32 1.0, %v525
  %v527 = vtanh.pop %v520
  %v529 = vrot.slane %v434, 6
  %v531 = vmul.f32 %v526, %v529
  %533 = vrot.lane.b32.xlu0 %v527, 64
  %v534 = vpop.permute.xlu0 %533
  %v536 = vmul.f32 %v526, %v534
  %538 = vrot.lane.b32.xlu0 %v536, 32
  %v539 = vpop.permute.xlu0 %538
  %v541 = vadd.f32 %v531, %v539
  %v542 = vtanh.pop %v541
  %544 = vrot.lane.b32.xlu0 %v542, 64
  %v545 = vpop.permute.xlu0 %544
  %v547 = vmul.f32 %v526, %v545
  %v549 = vrot.slane %v547, 4
  %550 = vrot.lane.b32.xlu0 %v549, 32
  %v551 = vpop.permute.xlu0 %550
  %v552 = vsel %vm236, %v551, 0
  %554 = vmatprep.subr.mxu0 0.0
  %555 = vmatpush1.msra.mxu0 %v28
  %556 = vmatprep.subr.mxu0 0.0
  %557 = vmatpush1.msra.mxu0 %v29
  %558 = vmatprep.subr.mxu0 0.0
  %559 = vmatpush1.msra.mxu0 %v30
  %560 = vmatprep.subr.mxu0 0.0
  %561 = vmatpush1.msra.mxu0 %v31
  %562 = vmatprep.subr.mxu0 0.0
  %563 = vmatpush1.msra.mxu0 0.0
  %564 = vmatprep.subr.mxu0 0.0
  %565 = vmatpush1.msra.mxu0 0.0
  %566 = vmatprep.subr.mxu0 0.0
  %567 = vmatpush1.msra.mxu0 0.0
  %568 = vmatprep.subr.mxu0 0.0
  %569 = vmatpush1.msra.mxu0 0.0
  %570 = vmatprep.subr.mxu0 0.0
  %571 = vmatpush1.msra.mxu0 0.0
  %572 = vmatprep.subr.mxu0 0.0
  %573 = vmatpush1.msra.mxu0 0.0
  %574 = vmatprep.subr.mxu0 0.0
  %575 = vmatpush1.msra.mxu0 0.0
  %576 = vmatprep.subr.mxu0 0.0
  %577 = vmatpush1.msra.mxu0 0.0
  %578 = vmatprep.subr.mxu0 0.0
  %579 = vmatpush1.msra.mxu0 0.0
  %580 = vmatprep.subr.mxu0 0.0
  %581 = vmatpush1.msra.mxu0 0.0
  %582 = vmatprep.subr.mxu0 0.0
  %583 = vmatpush1.msra.mxu0 0.0
  %584 = vmatprep.subr.mxu0 0.0
  %585 = vmatpush1.msra.mxu0 0.0
  %586 = vmatprep.subr.mxu0 0.0
  %587 = vmatpush1.msra.mxu0 0.0
  %588 = vmatprep.subr.mxu0 0.0
  %589 = vmatpush1.msra.mxu0 0.0
  %590 = vmatprep.subr.mxu0 0.0
  %591 = vmatpush1.msra.mxu0 0.0
  %592 = vmatprep.subr.mxu0 0.0
  %593 = vmatpush1.msra.mxu0 0.0
  %594 = vmatprep.subr.mxu0 0.0
  %595 = vmatpush1.msra.mxu0 0.0
  %596 = vmatprep.subr.mxu0 0.0
  %597 = vmatpush1.msra.mxu0 0.0
  %598 = vmatprep.subr.mxu0 0.0
  %599 = vmatpush1.msra.mxu0 0.0
  %600 = vmatprep.subr.mxu0 0.0
  %601 = vmatpush1.msra.mxu0 0.0
  %602 = vmatprep.subr.mxu0 0.0
  %603 = vmatpush1.msra.mxu0 0.0
  %604 = vmatprep.subr.mxu0 0.0
  %605 = vmatpush1.msra.mxu0 0.0
  %606 = vmatprep.subr.mxu0 0.0
  %607 = vmatpush1.msra.mxu0 0.0
  %608 = vmatprep.subr.mxu0 0.0
  %609 = vmatpush1.msra.mxu0 0.0
  %610 = vmatprep.subr.mxu0 0.0
  %611 = vmatpush1.msra.mxu0 0.0
  %612 = vmatprep.subr.mxu0 0.0
  %613 = vmatpush1.msra.mxu0 0.0
  %614 = vmatprep.subr.mxu0 0.0
  %615 = vmatpush1.msra.mxu0 0.0
  %616 = vmatprep.subr.mxu0 0.0
  %617 = vmatpush1.msra.mxu0 0.0
  %618 = vmatprep.mubr.f32.mxu0 0.0
  %619 = vmatmul.mubr.f32.gmra.mrb[0].mxu0 %v552
  %v620 = vpop.f32.mrb[0].mxu0
  %v621 = vadd.f32 0.0, %v620
  %v622 = vpop.f32.mrb[0].mxu0
  %623 = vdwg.mxu0
  %v625 = vrot.slane %v621, 2
  %v627 = vadd.f32 %v227, %v625
  %v628 = vxor.u32 %v627, 2147483648
  %v629 = vmul.f32 %v628, 1.442695
  %v630 = vpow.pop %v629
  %v631 = vadd.f32 %v630, 1.0
  %v632 = vrcp.pop %v631
  %v633 = vmul.f32 1.0, %v632
  %v634 = vtanh.pop %v627
  %v636 = vrot.slane %v541, 6
  %v638 = vmul.f32 %v633, %v636
  %640 = vrot.lane.b32.xlu0 %v634, 64
  %v641 = vpop.permute.xlu0 %640
  %v643 = vmul.f32 %v633, %v641
  %645 = vrot.lane.b32.xlu0 %v643, 32
  %v646 = vpop.permute.xlu0 %645
  %v648 = vadd.f32 %v638, %v646
  %v649 = vtanh.pop %v648
  %651 = vrot.lane.b32.xlu0 %v649, 64
  %v652 = vpop.permute.xlu0 %651
  %v654 = vmul.f32 %v633, %v652
  %v656 = vrot.slane %v654, 6
  %657 = vrot.lane.b32.xlu0 %v656, 32
  %v658 = vpop.permute.xlu0 %657
  %v659 = vsel %vm236, %v658, 0
  %661 = vmatprep.subr.mxu0 0.0
  %662 = vmatpush1.msra.mxu0 %v28
  %663 = vmatprep.subr.mxu0 0.0
  %664 = vmatpush1.msra.mxu0 %v29
  %665 = vmatprep.subr.mxu0 0.0
  %666 = vmatpush1.msra.mxu0 %v30
  %667 = vmatprep.subr.mxu0 0.0
  %668 = vmatpush1.msra.mxu0 %v31
  %669 = vmatprep.subr.mxu0 0.0
  %670 = vmatpush1.msra.mxu0 0.0
  %671 = vmatprep.subr.mxu0 0.0
  %672 = vmatpush1.msra.mxu0 0.0
  %673 = vmatprep.subr.mxu0 0.0
  %674 = vmatpush1.msra.mxu0 0.0
  %675 = vmatprep.subr.mxu0 0.0
  %676 = vmatpush1.msra.mxu0 0.0
  %677 = vmatprep.subr.mxu0 0.0
  %678 = vmatpush1.msra.mxu0 0.0
  %679 = vmatprep.subr.mxu0 0.0
  %680 = vmatpush1.msra.mxu0 0.0
  %681 = vmatprep.subr.mxu0 0.0
  %682 = vmatpush1.msra.mxu0 0.0
  %683 = vmatprep.subr.mxu0 0.0
  %684 = vmatpush1.msra.mxu0 0.0
  %685 = vmatprep.subr.mxu0 0.0
  %686 = vmatpush1.msra.mxu0 0.0
  %687 = vmatprep.subr.mxu0 0.0
  %688 = vmatpush1.msra.mxu0 0.0
  %689 = vmatprep.subr.mxu0 0.0
  %690 = vmatpush1.msra.mxu0 0.0
  %691 = vmatprep.subr.mxu0 0.0
  %692 = vmatpush1.msra.mxu0 0.0
  %693 = vmatprep.subr.mxu0 0.0
  %694 = vmatpush1.msra.mxu0 0.0
  %695 = vmatprep.subr.mxu0 0.0
  %696 = vmatpush1.msra.mxu0 0.0
  %697 = vmatprep.subr.mxu0 0.0
  %698 = vmatpush1.msra.mxu0 0.0
  %699 = vmatprep.subr.mxu0 0.0
  %700 = vmatpush1.msra.mxu0 0.0
  %701 = vmatprep.subr.mxu0 0.0
  %702 = vmatpush1.msra.mxu0 0.0
  %703 = vmatprep.subr.mxu0 0.0
  %704 = vmatpush1.msra.mxu0 0.0
  %705 = vmatprep.subr.mxu0 0.0
  %706 = vmatpush1.msra.mxu0 0.0
  %707 = vmatprep.subr.mxu0 0.0
  %708 = vmatpush1.msra.mxu0 0.0
  %709 = vmatprep.subr.mxu0 0.0
  %710 = vmatpush1.msra.mxu0 0.0
  %711 = vmatprep.subr.mxu0 0.0
  %712 = vmatpush1.msra.mxu0 0.0
  %713 = vmatprep.subr.mxu0 0.0
  %714 = vmatpush1.msra.mxu0 0.0
  %715 = vmatprep.subr.mxu0 0.0
  %716 = vmatpush1.msra.mxu0 0.0
  %717 = vmatprep.subr.mxu0 0.0
  %718 = vmatpush1.msra.mxu0 0.0
  %719 = vmatprep.subr.mxu0 0.0
  %720 = vmatpush1.msra.mxu0 0.0
  %721 = vmatprep.subr.mxu0 0.0
  %722 = vmatpush1.msra.mxu0 0.0
  %723 = vmatprep.subr.mxu0 0.0
  %724 = vmatpush1.msra.mxu0 0.0
  %725 = vmatprep.mubr.f32.mxu0 0.0
  %726 = vmatmul.mubr.f32.gmra.mrb[0].mxu0 %v659
  %v727 = vpop.f32.mrb[0].mxu0
  %v728 = vadd.f32 0.0, %v727
  %v729 = vpop.f32.mrb[0].mxu0
  %730 = vdwg.mxu0
  %v731 = vadd.f32 %v232, %v728
  %v732 = vxor.u32 %v731, 2147483648
  %v733 = vmul.f32 %v732, 1.442695
  %v734 = vpow.pop %v733
  %v735 = vadd.f32 %v734, 1.0
  %v736 = vrcp.pop %v735
  %v737 = vmul.f32 1.0, %v736
  %v738 = vtanh.pop %v731
  %v740 = vrot.slane %v648, 6
  %v742 = vmul.f32 %v737, %v740
  %744 = vrot.lane.b32.xlu0 %v738, 64
  %v745 = vpop.permute.xlu0 %744
  %v747 = vmul.f32 %v737, %v745
  %749 = vrot.lane.b32.xlu0 %v747, 32
  %v750 = vpop.permute.xlu0 %749
  %v752 = vadd.f32 %v742, %v750
  %v753 = vtanh.pop %v752
  %755 = vrot.lane.b32.xlu0 %v753, 64
  %v756 = vpop.permute.xlu0 %755
  %v758 = vmul.f32 %v737, %v756
  %760 = vrot.lane.b32.xlu0 %v758, 32
  %v761 = vpop.permute.xlu0 %760
  %v762 = vsel %vm236, %v761, 0
  %764 = vmatprep.subr.mxu0 0.0
  %765 = vmatpush1.msra.mxu0 %v28
  %766 = vmatprep.subr.mxu0 0.0
  %767 = vmatpush1.msra.mxu0 %v29
  %768 = vmatprep.subr.mxu0 0.0
  %769 = vmatpush1.msra.mxu0 %v30
  %770 = vmatprep.subr.mxu0 0.0
  %771 = vmatpush1.msra.mxu0 %v31
  %772 = vmatprep.subr.mxu0 0.0
  %773 = vmatpush1.msra.mxu0 0.0
  %774 = vmatprep.subr.mxu0 0.0
  %775 = vmatpush1.msra.mxu0 0.0
  %776 = vmatprep.subr.mxu0 0.0
  %777 = vmatpush1.msra.mxu0 0.0
  %778 = vmatprep.subr.mxu0 0.0
  %779 = vmatpush1.msra.mxu0 0.0
  %780 = vmatprep.subr.mxu0 0.0
  %781 = vmatpush1.msra.mxu0 0.0
  %782 = vmatprep.subr.mxu0 0.0
  %783 = vmatpush1.msra.mxu0 0.0
  %784 = vmatprep.subr.mxu0 0.0
  %785 = vmatpush1.msra.mxu0 0.0
  %786 = vmatprep.subr.mxu0 0.0
  %787 = vmatpush1.msra.mxu0 0.0
  %788 = vmatprep.subr.mxu0 0.0
  %789 = vmatpush1.msra.mxu0 0.0
  %790 = vmatprep.subr.mxu0 0.0
  %791 = vmatpush1.msra.mxu0 0.0
  %792 = vmatprep.subr.mxu0 0.0
  %793 = vmatpush1.msra.mxu0 0.0
  %794 = vmatprep.subr.mxu0 0.0
  %795 = vmatpush1.msra.mxu0 0.0
  %796 = vmatprep.subr.mxu0 0.0
  %797 = vmatpush1.msra.mxu0 0.0
  %798 = vmatprep.subr.mxu0 0.0
  %799 = vmatpush1.msra.mxu0 0.0
  %800 = vmatprep.subr.mxu0 0.0
  %801 = vmatpush1.msra.mxu0 0.0
  %802 = vmatprep.subr.mxu0 0.0
  %803 = vmatpush1.msra.mxu0 0.0
  %804 = vmatprep.subr.mxu0 0.0
  %805 = vmatpush1.msra.mxu0 0.0
  %806 = vmatprep.subr.mxu0 0.0
  %807 = vmatpush1.msra.mxu0 0.0
  %808 = vmatprep.subr.mxu0 0.0
  %809 = vmatpush1.msra.mxu0 0.0
  %810 = vmatprep.subr.mxu0 0.0
  %811 = vmatpush1.msra.mxu0 0.0
  %812 = vmatprep.subr.mxu0 0.0
  %813 = vmatpush1.msra.mxu0 0.0
  %814 = vmatprep.subr.mxu0 0.0
  %815 = vmatpush1.msra.mxu0 0.0
  %816 = vmatprep.subr.mxu0 0.0
  %817 = vmatpush1.msra.mxu0 0.0
  %818 = vmatprep.subr.mxu0 0.0
  %819 = vmatpush1.msra.mxu0 0.0
  %820 = vmatprep.subr.mxu0 0.0
  %821 = vmatpush1.msra.mxu0 0.0
  %822 = vmatprep.subr.mxu0 0.0
  %823 = vmatpush1.msra.mxu0 0.0
  %824 = vmatprep.subr.mxu0 0.0
  %825 = vmatpush1.msra.mxu0 0.0
  %826 = vmatprep.subr.mxu0 0.0
  %827 = vmatpush1.msra.mxu0 0.0
  %828 = vmatprep.mubr.f32.mxu0 0.0
  %829 = vmatmul.mubr.f32.gmra.mrb[0].mxu0 %v762
  %v830 = vpop.f32.mrb[0].mxu0
  %v831 = vadd.f32 0.0, %v830
  %v832 = vpop.f32.mrb[0].mxu0
  %833 = vdwg.mxu0
  %v835 = vrot.slane %v831, 6
  %v837 = vadd.f32 %v232, %v835
  %v838 = vxor.u32 %v837, 2147483648
  %v839 = vmul.f32 %v838, 1.442695
  %v840 = vpow.pop %v839
  %v841 = vadd.f32 %v840, 1.0
  %v842 = vrcp.pop %v841
  %v843 = vmul.f32 1.0, %v842
  %v844 = vtanh.pop %v837
  %v846 = vrot.slane %v752, 6
  %v848 = vmul.f32 %v843, %v846
  %850 = vrot.lane.b32.xlu0 %v844, 64
  %v851 = vpop.permute.xlu0 %850
  %v853 = vmul.f32 %v843, %v851
  %855 = vrot.lane.b32.xlu0 %v853, 32
  %v856 = vpop.permute.xlu0 %855
  %v858 = vadd.f32 %v848, %v856
  %v859 = vtanh.pop %v858
  %861 = vrot.lane.b32.xlu0 %v859, 64
  %v862 = vpop.permute.xlu0 %861
  %v864 = vmul.f32 %v843, %v862
  %v866 = vrot.slane %v864, 2
  %867 = vrot.lane.b32.xlu0 %v866, 32
  %v868 = vpop.permute.xlu0 %867
  %v869 = vsel %vm236, %v868, 0
  %871 = vmatprep.subr.mxu0 0.0
  %872 = vmatpush1.msra.mxu0 %v28
  %873 = vmatprep.subr.mxu0 0.0
  %874 = vmatpush1.msra.mxu0 %v29
  %875 = vmatprep.subr.mxu0 0.0
  %876 = vmatpush1.msra.mxu0 %v30
  %877 = vmatprep.subr.mxu0 0.0
  %878 = vmatpush1.msra.mxu0 %v31
  %879 = vmatprep.subr.mxu0 0.0
  %880 = vmatpush1.msra.mxu0 0.0
  %881 = vmatprep.subr.mxu0 0.0
  %882 = vmatpush1.msra.mxu0 0.0
  %883 = vmatprep.subr.mxu0 0.0
  %884 = vmatpush1.msra.mxu0 0.0
  %885 = vmatprep.subr.mxu0 0.0
  %886 = vmatpush1.msra.mxu0 0.0
  %887 = vmatprep.subr.mxu0 0.0
  %888 = vmatpush1.msra.mxu0 0.0
  %889 = vmatprep.subr.mxu0 0.0
  %890 = vmatpush1.msra.mxu0 0.0
  %891 = vmatprep.subr.mxu0 0.0
  %892 = vmatpush1.msra.mxu0 0.0
  %893 = vmatprep.subr.mxu0 0.0
  %894 = vmatpush1.msra.mxu0 0.0
  %895 = vmatprep.subr.mxu0 0.0
  %896 = vmatpush1.msra.mxu0 0.0
  %897 = vmatprep.subr.mxu0 0.0
  %898 = vmatpush1.msra.mxu0 0.0
  %899 = vmatprep.subr.mxu0 0.0
  %900 = vmatpush1.msra.mxu0 0.0
  %901 = vmatprep.subr.mxu0 0.0
  %902 = vmatpush1.msra.mxu0 0.0
  %903 = vmatprep.subr.mxu0 0.0
  %904 = vmatpush1.msra.mxu0 0.0
  %905 = vmatprep.subr.mxu0 0.0
  %906 = vmatpush1.msra.mxu0 0.0
  %907 = vmatprep.subr.mxu0 0.0
  %908 = vmatpush1.msra.mxu0 0.0
  %909 = vmatprep.subr.mxu0 0.0
  %910 = vmatpush1.msra.mxu0 0.0
  %911 = vmatprep.subr.mxu0 0.0
  %912 = vmatpush1.msra.mxu0 0.0
  %913 = vmatprep.subr.mxu0 0.0
  %914 = vmatpush1.msra.mxu0 0.0
  %915 = vmatprep.subr.mxu0 0.0
  %916 = vmatpush1.msra.mxu0 0.0
  %917 = vmatprep.subr.mxu0 0.0
  %918 = vmatpush1.msra.mxu0 0.0
  %919 = vmatprep.subr.mxu0 0.0
  %920 = vmatpush1.msra.mxu0 0.0
  %921 = vmatprep.subr.mxu0 0.0
  %922 = vmatpush1.msra.mxu0 0.0
  %923 = vmatprep.subr.mxu0 0.0
  %924 = vmatpush1.msra.mxu0 0.0
  %925 = vmatprep.subr.mxu0 0.0
  %926 = vmatpush1.msra.mxu0 0.0
  %927 = vmatprep.subr.mxu0 0.0
  %928 = vmatpush1.msra.mxu0 0.0
  %929 = vmatprep.subr.mxu0 0.0
  %930 = vmatpush1.msra.mxu0 0.0
  %931 = vmatprep.subr.mxu0 0.0
  %932 = vmatpush1.msra.mxu0 0.0
  %933 = vmatprep.subr.mxu0 0.0
  %934 = vmatpush1.msra.mxu0 0.0
  %935 = vmatprep.mubr.f32.mxu0 0.0
  %936 = vmatmul.mubr.f32.gmra.mrb[0].mxu0 %v869
  %v937 = vpop.f32.mrb[0].mxu0
  %v938 = vadd.f32 0.0, %v937
  %v939 = vpop.f32.mrb[0].mxu0
  %940 = vdwg.mxu0
  %v942 = vrot.slane %v938, 4
  %v944 = vadd.f32 %v232, %v942
  %v945 = vxor.u32 %v944, 2147483648
  %v946 = vmul.f32 %v945, 1.442695
  %v947 = vpow.pop %v946
  %v948 = vadd.f32 %v947, 1.0
  %v949 = vrcp.pop %v948
  %v950 = vmul.f32 1.0, %v949
  %v951 = vtanh.pop %v944
  %v953 = vrot.slane %v858, 6
  %v955 = vmul.f32 %v950, %v953
  %957 = vrot.lane.b32.xlu0 %v951, 64
  %v958 = vpop.permute.xlu0 %957
  %v960 = vmul.f32 %v950, %v958
  %962 = vrot.lane.b32.xlu0 %v960, 32
  %v963 = vpop.permute.xlu0 %962
  %v965 = vadd.f32 %v955, %v963
  %v966 = vtanh.pop %v965
  %968 = vrot.lane.b32.xlu0 %v966, 64
  %v969 = vpop.permute.xlu0 %968
  %v971 = vmul.f32 %v950, %v969
  %v973 = vrot.slane %v971, 4
  %974 = vrot.lane.b32.xlu0 %v973, 32
  %v975 = vpop.permute.xlu0 %974
  %v976 = vsel %vm236, %v975, 0
  %978 = vmatprep.subr.mxu0 0.0
  %979 = vmatpush1.msra.mxu0 %v28
  %980 = vmatprep.subr.mxu0 0.0
  %981 = vmatpush1.msra.mxu0 %v29
  %982 = vmatprep.subr.mxu0 0.0
  %983 = vmatpush1.msra.mxu0 %v30
  %984 = vmatprep.subr.mxu0 0.0
  %985 = vmatpush1.msra.mxu0 %v31
  %986 = vmatprep.subr.mxu0 0.0
  %987 = vmatpush1.msra.mxu0 0.0
  %988 = vmatprep.subr.mxu0 0.0
  %989 = vmatpush1.msra.mxu0 0.0
  %990 = vmatprep.subr.mxu0 0.0
  %991 = vmatpush1.msra.mxu0 0.0
  %992 = vmatprep.subr.mxu0 0.0
  %993 = vmatpush1.msra.mxu0 0.0
  %994 = vmatprep.subr.mxu0 0.0
  %995 = vmatpush1.msra.mxu0 0.0
  %996 = vmatprep.subr.mxu0 0.0
  %997 = vmatpush1.msra.mxu0 0.0
  %998 = vmatprep.subr.mxu0 0.0
  %999 = vmatpush1.msra.mxu0 0.0
  %1000 = vmatprep.subr.mxu0 0.0
  %1001 = vmatpush1.msra.mxu0 0.0
  %1002 = vmatprep.subr.mxu0 0.0
  %1003 = vmatpush1.msra.mxu0 0.0
  %1004 = vmatprep.subr.mxu0 0.0
  %1005 = vmatpush1.msra.mxu0 0.0
  %1006 = vmatprep.subr.mxu0 0.0
  %1007 = vmatpush1.msra.mxu0 0.0
  %1008 = vmatprep.subr.mxu0 0.0
  %1009 = vmatpush1.msra.mxu0 0.0
  %1010 = vmatprep.subr.mxu0 0.0
  %1011 = vmatpush1.msra.mxu0 0.0
  %1012 = vmatprep.subr.mxu0 0.0
  %1013 = vmatpush1.msra.mxu0 0.0
  %1014 = vmatprep.subr.mxu0 0.0
  %1015 = vmatpush1.msra.mxu0 0.0
  %1016 = vmatprep.subr.mxu0 0.0
  %1017 = vmatpush1.msra.mxu0 0.0
  %1018 = vmatprep.subr.mxu0 0.0
  %1019 = vmatpush1.msra.mxu0 0.0
  %1020 = vmatprep.subr.mxu0 0.0
  %1021 = vmatpush1.msra.mxu0 0.0
  %1022 = vmatprep.subr.mxu0 0.0
  %1023 = vmatpush1.msra.mxu0 0.0
  %1024 = vmatprep.subr.mxu0 0.0
  %1025 = vmatpush1.msra.mxu0 0.0
  %1026 = vmatprep.subr.mxu0 0.0
  %1027 = vmatpush1.msra.mxu0 0.0
  %1028 = vmatprep.subr.mxu0 0.0
  %1029 = vmatpush1.msra.mxu0 0.0
  %1030 = vmatprep.subr.mxu0 0.0
  %1031 = vmatpush1.msra.mxu0 0.0
  %1032 = vmatprep.subr.mxu0 0.0
  %1033 = vmatpush1.msra.mxu0 0.0
  %1034 = vmatprep.subr.mxu0 0.0
  %1035 = vmatpush1.msra.mxu0 0.0
  %1036 = vmatprep.subr.mxu0 0.0
  %1037 = vmatpush1.msra.mxu0 0.0
  %1038 = vmatprep.subr.mxu0 0.0
  %1039 = vmatpush1.msra.mxu0 0.0
  %1040 = vmatprep.subr.mxu0 0.0
  %1041 = vmatpush1.msra.mxu0 0.0
  %1042 = vmatprep.mubr.f32.mxu0 0.0
  %1043 = vmatmul.mubr.f32.gmra.mrb[0].mxu0 %v976
  %v1044 = vpop.f32.mrb[0].mxu0
  %v1045 = vadd.f32 0.0, %v1044
  %v1046 = vpop.f32.mrb[0].mxu0
  %1047 = vdwg.mxu0
  %v1049 = vrot.slane %v1045, 2
  %v1051 = vadd.f32 %v232, %v1049
  %v1052 = vxor.u32 %v1051, 2147483648
  %v1053 = vmul.f32 %v1052, 1.442695
  %v1054 = vpow.pop %v1053
  %v1055 = vadd.f32 %v1054, 1.0
  %v1056 = vrcp.pop %v1055
  %v1057 = vmul.f32 1.0, %v1056
  %v1058 = vtanh.pop %v1051
  %v1060 = vrot.slane %v965, 6
  %v1062 = vmul.f32 %v1057, %v1060
  %1064 = vrot.lane.b32.xlu0 %v1058, 64
  %v1065 = vpop.permute.xlu0 %1064
  %v1067 = vmul.f32 %v1057, %v1065
  %1069 = vrot.lane.b32.xlu0 %v1067, 32
  %v1070 = vpop.permute.xlu0 %1069
  %v1072 = vadd.f32 %v1062, %v1070
  %v1073 = vtanh.pop %v1072
  %1075 = vrot.lane.b32.xlu0 %v1073, 64
  %v1076 = vpop.permute.xlu0 %1075
  %v1078 = vmul.f32 %v1057, %v1076
  %1080 = vrot.lane.b32.xlu0 %v1078, 32
  %v1081 = vpop.permute.xlu0 %1080
  %v1083 = vsel %vm236, %v1081, %v1072
  %vm1084 = vcmask 523270
  %1085 = vst.msk [vmem:[%s6 - $0x6] sm:$0xc0] %vm1084, %v1083
  %v1086 = vsel %vm130, %v334, %v440
  %v1087 = vsel %vm134, %v1086, %v547
  %v1088 = vsel %vm138, %v1087, %v654
  %v1089 = vsel %vm130, %v758, %v864
  %v1090 = vsel %vm134, %v1089, %v971
  %v1091 = vsel %vm138, %v1090, %v1078
  %v1092 = vlaneseq
  %v1093 = vshrl.u32 %v1092, 7
  %v1094 = vsub.s32 0, %v1093
  %v1095 = vrot.slane %v37, %v1094
  %1098 = vrot.lane.b32.xlu0 %v1088, 32
  %v1099 = vpop.permute.xlu0 %1098
  %1100 = vrot.lane.b32.xlu0 %v1091, 32
  %v1101 = vpop.permute.xlu0 %1100
  %v1102 = vsel %vm236, %v1099, 0
  %v1104 = vsel %vm236, %v1101, 0
  %1106 = vmatprep.subr.mxu0 0.0
  %1107 = vmatpush1.msra.mxu0 %v32
  %1108 = vmatprep.subr.mxu0 0.0
  %1109 = vmatpush1.msra.mxu0 %v33
  %1110 = vmatprep.subr.mxu0 0.0
  %1111 = vmatpush1.msra.mxu0 %v34
  %1112 = vmatprep.subr.mxu0 0.0
  %1113 = vmatpush1.msra.mxu0 %v35
  %1114 = vmatprep.subr.mxu0 0.0
  %1115 = vmatpush1.msra.mxu0 0.0
  %1116 = vmatprep.subr.mxu0 0.0
  %1117 = vmatpush1.msra.mxu0 0.0
  %1118 = vmatprep.subr.mxu0 0.0
  %1119 = vmatpush1.msra.mxu0 0.0
  %1120 = vmatprep.subr.mxu0 0.0
  %1121 = vmatpush1.msra.mxu0 0.0
  %1122 = vmatprep.subr.mxu0 0.0
  %1123 = vmatpush1.msra.mxu0 0.0
  %1124 = vmatprep.subr.mxu0 0.0
  %1125 = vmatpush1.msra.mxu0 0.0
  %1126 = vmatprep.subr.mxu0 0.0
  %1127 = vmatpush1.msra.mxu0 0.0
  %1128 = vmatprep.subr.mxu0 0.0
  %1129 = vmatpush1.msra.mxu0 0.0
  %1130 = vmatprep.subr.mxu0 0.0
  %1131 = vmatpush1.msra.mxu0 0.0
  %1132 = vmatprep.subr.mxu0 0.0
  %1133 = vmatpush1.msra.mxu0 0.0
  %1134 = vmatprep.subr.mxu0 0.0
  %1135 = vmatpush1.msra.mxu0 0.0
  %1136 = vmatprep.subr.mxu0 0.0
  %1137 = vmatpush1.msra.mxu0 0.0
  %1138 = vmatprep.subr.mxu0 0.0
  %1139 = vmatpush1.msra.mxu0 0.0
  %1140 = vmatprep.subr.mxu0 0.0
  %1141 = vmatpush1.msra.mxu0 0.0
  %1142 = vmatprep.subr.mxu0 0.0
  %1143 = vmatpush1.msra.mxu0 0.0
  %1144 = vmatprep.subr.mxu0 0.0
  %1145 = vmatpush1.msra.mxu0 0.0
  %1146 = vmatprep.subr.mxu0 0.0
  %1147 = vmatpush1.msra.mxu0 0.0
  %1148 = vmatprep.subr.mxu0 0.0
  %1149 = vmatpush1.msra.mxu0 0.0
  %1150 = vmatprep.subr.mxu0 0.0
  %1151 = vmatpush1.msra.mxu0 0.0
  %1152 = vmatprep.subr.mxu0 0.0
  %1153 = vmatpush1.msra.mxu0 0.0
  %1154 = vmatprep.subr.mxu0 0.0
  %1155 = vmatpush1.msra.mxu0 0.0
  %1156 = vmatprep.subr.mxu0 0.0
  %1157 = vmatpush1.msra.mxu0 0.0
  %1158 = vmatprep.subr.mxu0 0.0
  %1159 = vmatpush1.msra.mxu0 0.0
  %1160 = vmatprep.subr.mxu0 0.0
  %1161 = vmatpush1.msra.mxu0 0.0
  %1162 = vmatprep.subr.mxu0 0.0
  %1163 = vmatpush1.msra.mxu0 0.0
  %1164 = vmatprep.subr.mxu0 0.0
  %1165 = vmatpush1.msra.mxu0 0.0
  %1166 = vmatprep.subr.mxu0 0.0
  %1167 = vmatpush1.msra.mxu0 0.0
  %1168 = vmatprep.subr.mxu0 0.0
  %1169 = vmatpush1.msra.mxu0 0.0
  %1170 = vmatprep.mubr.f32.mxu0 0.0
  %1171 = vmatmul.mubr.f32.gmra.mrb[0].mxu0 %v1102
  %v1172 = vpop.f32.mrb[0].mxu0
  %v1173 = vadd.f32 %v1095, %v1172
  %v1174 = vpop.f32.mrb[0].mxu0
  %1175 = vmatprep.mubr.f32.mxu0 0.0
  %1176 = vmatmul.mubr.f32.gmra.mrb[0].mxu0 %v1104
  %v1177 = vpop.f32.mrb[0].mxu0
  %v1178 = vadd.f32 %v1095, %v1177
  %v1179 = vpop.f32.mrb[0].mxu0
  %1180 = vdwg.mxu0
  %1181 = vst [vmem:[%s5] sm:$0x3] %v1173
  %v1184 = vunpack.c.l.s4 1983009808
  %v1185 = vunpack.c.0.s8 %v1184
  %v1186 = vlaneseq
  %v1187 = vshrl.u32 %v1186, 7
  %v1188 = vsub.s32 %v1185, %v1187
  %v1189 = vrot.slane %v1173, %v1188
  %v1190 = vcombine.high %v1189, %v1189
  %1192 = vst [vmem:[%s5 + $0x2] sm:$0x3] %v1190
  %v1193 = vcombine.high %v1173, %v1173
  %v1195 = vunpack.c.l.s4 1983009808
  %v1196 = vunpack.c.0.s8 %v1195
  %v1197 = vlaneseq
  %v1198 = vshrl.u32 %v1197, 7
  %v1199 = vsub.s32 %v1196, %v1198
  %v1200 = vrot.slane %v1193, %v1199
  %1202 = vst [vmem:[%s5 + $0x4] sm:$0x3] %v1200
  %v1203 = vcombine.high %v1200, %v1200
  %1205 = vst [vmem:[%s5 + $0x6] sm:$0x3] %v1203
  %1206 = vst [vmem:[%s5 + $0x8] sm:$0x3] %v1178
  %v1209 = vunpack.c.l.s4 1983009808
  %v1210 = vunpack.c.0.s8 %v1209
  %v1211 = vlaneseq
  %v1212 = vshrl.u32 %v1211, 7
  %v1213 = vsub.s32 %v1210, %v1212
  %v1214 = vrot.slane %v1178, %v1213
  %v1215 = vcombine.high %v1214, %v1214
  %1217 = vst [vmem:[%s5 + $0xa] sm:$0x3] %v1215
  %v1218 = vcombine.high %v1178, %v1178
  %v1220 = vunpack.c.l.s4 1983009808
  %v1221 = vunpack.c.0.s8 %v1220
  %v1222 = vlaneseq
  %v1223 = vshrl.u32 %v1222, 7
  %v1224 = vsub.s32 %v1221, %v1223
  %v1225 = vrot.slane %v1218, %v1224
  %1227 = vst [vmem:[%s5 + $0xc] sm:$0x3] %v1225
  %v1228 = vcombine.high %v1225, %v1225
  %1230 = vst [vmem:[%s5 + $0xe] sm:$0x3] %v1228
  // Predicated region
  $region18: #{simple_lstm_forward.1} parent=0 // pred_check
    _
  $region19: #{simple_lstm_forward.1} parent=0 // pred_check_branch
    %1232 = sbr.rel (0) target = $region21
  $region20: #{simple_lstm_forward.1} parent=0 // pred_region
    _
  $region21: #{simple_lstm_forward.1} parent=0 // pred_fallthru
    _
  // Predicated region
  $region22: #{simple_lstm_forward.1} parent=0 // pred_check
    _
  $region23: #{simple_lstm_forward.1} parent=0 // pred_check_branch
    %1234 = sbr.rel (0) target = $region25
  $region24: #{simple_lstm_forward.1} parent=0 // pred_region
    _
  $region25: #{simple_lstm_forward.1} parent=0 // pred_fallthru
    _
  // Predicated region
  $region26: #{simple_lstm_forward.1} parent=0 // pred_check
    _
  $region27: #{simple_lstm_forward.1} parent=0 // pred_check_branch
    %1236 = sbr.rel (0) target = $region29
  $region28: #{simple_lstm_forward.1} parent=0 // pred_region
    _
  $region29: #{simple_lstm_forward.1} parent=0 // pred_fallthru
    _
  // Predicated region
  $region30: #{simple_lstm_forward.1} parent=0 // pred_check
    _
  $region31: #{simple_lstm_forward.1} parent=0 // pred_check_branch
    %1238 = sbr.rel (0) target = $region33
  $region32: #{simple_lstm_forward.1} parent=0 // pred_region
    _
  $region33: #{simple_lstm_forward.1} parent=0 // pred_fallthru
    _

</llo_original>
